<compile_context>
chip_gen: v5e
topology: v5e:2x2
jax: 0.10.0
libtpu: 0.0.40
codegen_flags: <defaults>
</compile_context>

<pallas_src>
import functools

import jax
import jax.numpy as jnp
from jax import lax
from jax.experimental import pallas as pl
from jax.experimental.pallas import tpu as pltpu


def _channel_attention_kernel(x_ref, wq_ref, wk_ref, wv_ref, bqkv_ref,
                              wp_ref, bp_ref, mask_ref, o_ref, *,
                              scale, group_width, num_groups, block_b):
    """Fused ChannelAttention for `block_b` batch elements.

    x_ref    : (Bt, N, C)  input tokens (compute dtype, e.g. bf16)
    wq/wk/wv : (C, C)      per-operand qkv weights, transposed for x @ W
    bqkv_ref : (3, C)      qkv bias rows [q; k; v] (zeros when qkv_bias=False), f32
    wp_ref   : (C, C)      output projection weight, transposed for y @ W
    bp_ref   : (1, C)      output projection bias, f32
    mask_ref : (gw, gw)    additive block-diagonal mask (0 / -1e30), f32
    o_ref    : (Bt, N, C)  output
    """
    Bt, N, C = x_ref.shape
    cdt = wq_ref.dtype  # compute (MXU operand) dtype

    # Flatten the batch block so the projections run as one big MXU matmul.
    x = x_ref[...].reshape(Bt * N, C).astype(cdt)
    bqkv = bqkv_ref[...].astype(jnp.float32)                         # (3, C)

    # --- QKV projections (MXU, bf16 feeds, f32 accumulation) -----------------
    q = jnp.dot(x, wq_ref[...], preferred_element_type=jnp.float32) + bqkv[0:1]
    k = jnp.dot(x, wk_ref[...], preferred_element_type=jnp.float32) + bqkv[1:2]
    v = jnp.dot(x, wv_ref[...], preferred_element_type=jnp.float32) + bqkv[2:3]

    # Scale k (as in PyTorch: k = k * scale before k^T @ v), then cast the MXU
    # operands back to the compute dtype.
    k = (k * jnp.float32(scale)).astype(cdt)
    v = v.astype(cdt)
    q = q.astype(cdt)

    mask = mask_ref[...]                                              # (gw, gw) f32

    y_parts = []
    for b in range(block_b):                       # short static loop (unrolled)
        r0 = b * N
        qb = q[r0:r0 + N]                          # sublane-aligned static slices
        kb = k[r0:r0 + N]
        vb = v[r0:r0 + N]
        g_parts = []
        for g in range(num_groups):                # head groups of width gw
            c0 = g * group_width
            kg = kb[:, c0:c0 + group_width]
            vg = vb[:, c0:c0 + group_width]
            qg = qb[:, c0:c0 + group_width]

            # Gram over tokens: s[i, j] = sum_n kg[n, i] * vg[n, j]   (MXU)
            s = lax.dot_general(kg, vg, (((0,), (0,)), ((), ())),
                                preferred_element_type=jnp.float32)
            s = s + mask                            # block-diagonal mask (per head)

            # Row-wise softmax == per-head softmax(dim=-1) of the d x d blocks.
            s = s - jnp.max(s, axis=-1, keepdims=True)
            p = jnp.exp(s)
            p = p / jnp.sum(p, axis=-1, keepdims=True)

            # y[n, i] = sum_j qg[n, j] * p[i, j]  == q_h @ A_h^T      (MXU)
            yg = lax.dot_general(qg, p.astype(cdt), (((1,), (1,)), ((), ())),
                                 preferred_element_type=jnp.float32)
            g_parts.append(yg)
        y_parts.append(g_parts[0] if num_groups == 1
                       else jnp.concatenate(g_parts, axis=-1))
    y = y_parts[0] if block_b == 1 else jnp.concatenate(y_parts, axis=0)

    # --- Output projection ----------------------------------------------------
    out = jnp.dot(y.astype(cdt), wp_ref[...], preferred_element_type=jnp.float32)
    out = out + bp_ref[...].astype(jnp.float32)

    o_ref[...] = out.reshape(Bt, N, C).astype(o_ref.dtype)


def _pick_heads_per_group(num_heads, head_dim):
    """Largest #heads per group s.t. group width is <= 256 and lane aligned."""
    C = num_heads * head_dim
    if C <= 256:
        return num_heads                                   # single group
    for hg in range(num_heads, 0, -1):
        if num_heads % hg:
            continue
        gw = hg * head_dim
        if gw <= 256 and gw % 128 == 0:
            return hg
    return num_heads                                       # fallback: full C


def channel_attention(x, qkv_weight, qkv_bias, proj_weight, proj_bias, num_heads,
                      *, compute_dtype=jnp.bfloat16, block_b=None,
                      vmem_limit_bytes=32 * 1024 * 1024):
    """JAX wrapper.

    x           : (B, N, C)
    qkv_weight  : (3C, C)   PyTorch nn.Linear layout
    qkv_bias    : (3C,) or None
    proj_weight : (C, C)    PyTorch nn.Linear layout
    proj_bias   : (C,)
    """
    B, N, C = x.shape
    assert C % num_heads == 0
    d = C // num_heads
    scale = float(d) ** -0.5
    out_dtype = x.dtype
    cdt = jnp.dtype(compute_dtype)

    # Head grouping (single group at the demo C=128).
    hg = _pick_heads_per_group(num_heads, d)
    num_groups = num_heads // hg
    gw = hg * d

    # Batch blocking: largest divisor of B whose rows fill (but don't exceed)
    # one 256-row MXU pass.
    if block_b is None:
        block_b = 1
        for cand in range(1, B + 1):
            if B % cand == 0 and cand * N <= 256:
                block_b = cand
    assert B % block_b == 0

    # Glue: split + transpose weights once so the kernel does plain x @ W, and
    # cast MXU operands to the compute dtype (bf16 feeds, f32 accumulation).
    w = jnp.asarray(qkv_weight)
    wq_t = w[0 * C:1 * C].T.astype(cdt)                    # (C, C)
    wk_t = w[1 * C:2 * C].T.astype(cdt)
    wv_t = w[2 * C:3 * C].T.astype(cdt)
    wp_t = jnp.asarray(proj_weight).T.astype(cdt)          # (C, C)
    if qkv_bias is None:
        bqkv = jnp.zeros((3, C), jnp.float32)
    else:
        bqkv = jnp.asarray(qkv_bias, jnp.float32).reshape(3, C)
    bproj = jnp.asarray(proj_bias, jnp.float32).reshape(1, C)
    x_c = x.astype(cdt)

    # Additive block-diagonal mask for one head group (identical for all groups),
    # precomputed once and kept resident in VMEM.
    gid = jnp.arange(gw, dtype=jnp.int32) // d
    mask_add = jnp.where(gid[:, None] == gid[None, :],
                         jnp.float32(0.0), jnp.float32(-1e30))

    kernel = functools.partial(_channel_attention_kernel, scale=scale,
                               group_width=gw, num_groups=num_groups,
                               block_b=block_b)

    out = pl.pallas_call(
        kernel,
        out_shape=jax.ShapeDtypeStruct((B, N, C), out_dtype),
        grid=(B // block_b,),
        in_specs=[
            pl.BlockSpec((block_b, N, C), lambda i: (i, 0, 0)),   # x (streamed)
            pl.BlockSpec((C, C), lambda i: (0, 0)),               # wq (resident)
            pl.BlockSpec((C, C), lambda i: (0, 0)),               # wk
            pl.BlockSpec((C, C), lambda i: (0, 0)),               # wv
            pl.BlockSpec((3, C), lambda i: (0, 0)),               # qkv bias
            pl.BlockSpec((C, C), lambda i: (0, 0)),               # wproj
            pl.BlockSpec((1, C), lambda i: (0, 0)),               # proj bias
            pl.BlockSpec((gw, gw), lambda i: (0, 0)),             # block-diag mask
        ],
        out_specs=pl.BlockSpec((block_b, N, C), lambda i: (i, 0, 0)),
        compiler_params=pltpu.CompilerParams(
            dimension_semantics=("parallel",),                    # batch across TCs
            vmem_limit_bytes=vmem_limit_bytes),
    )(x_c, wq_t, wk_t, wv_t, bqkv, wp_t, bproj, mask_add)
    return out


def _reference(x, qkv_weight, qkv_bias, proj_weight, proj_bias, num_heads):
    """Pure-JAX mirror of the PyTorch forward (full f32 precision)."""
    B, N, C = x.shape
    d = C // num_heads
    scale = d ** (-0.5)
    hp = lax.Precision.HIGHEST
    qkv = jnp.einsum('bnc,oc->bno', x, qkv_weight, precision=hp)
    if qkv_bias is not None:
        qkv = qkv + qkv_bias
    qkv = qkv.reshape(B, N, 3, num_heads, d).transpose(2, 0, 3, 1, 4)  # (3,B,H,N,d)
    q, k, v = qkv[0], qkv[1], qkv[2]
    k = k * scale
    attn = jnp.einsum('bhnd,bhne->bhde', k, v, precision=hp)     # k^T @ v
    attn = jax.nn.softmax(attn, axis=-1)
    o = jnp.einsum('bhde,bhne->bhnd', attn, q, precision=hp)     # (attn @ q^T)^T
    o = o.transpose(0, 2, 1, 3).reshape(B, N, C)
    o = jnp.einsum('bnc,oc->bno', o, proj_weight, precision=hp) + proj_bias
    return o


if __name__ == "__main__":
    # Small but lane-dense shapes: C = 128 (one full vreg of lanes), N = 128.
    B, N, C, H = 4, 128, 128, 8

    key = jax.random.PRNGKey(0)
    kx, kw1, kw2, kb2 = jax.random.split(key, 4)

    x = jax.random.normal(kx, (B, N, C), dtype=jnp.float32)
    qkv_weight = jax.random.normal(kw1, (3 * C, C), dtype=jnp.float32) * (C ** -0.5)
    proj_weight = jax.random.normal(kw2, (C, C), dtype=jnp.float32) * (C ** -0.5)
    proj_bias = jax.random.normal(kb2, (C,), dtype=jnp.float32) * 0.02
    qkv_bias = None   # module default: qkv_bias=False

    ref = jax.block_until_ready(
        _reference(x, qkv_weight, qkv_bias, proj_weight, proj_bias, H))

    # 1) f32 compute path: tight correctness check of the kernel semantics.
    out_f32 = jax.block_until_ready(
        channel_attention(x, qkv_weight, qkv_bias, proj_weight, proj_bias, H,
                          compute_dtype=jnp.float32))
    assert out_f32.shape == (B, N, C)
    assert jnp.allclose(out_f32, ref, atol=1e-4, rtol=1e-4), "f32 mismatch vs reference"

    # 2) bf16 MXU-feed path (the performance configuration): loose sanity check.
    out_bf16 = jax.block_until_ready(
        channel_attention(x, qkv_weight, qkv_bias, proj_weight, proj_bias, H,
                          compute_dtype=jnp.bfloat16))
    assert out_bf16.shape == (B, N, C)
    assert float(jnp.max(jnp.abs(out_bf16 - ref))) < 0.25, "bf16 path diverged"

    print("KERNEL_OK")
</pallas_src>

<mosaic_0001>
module attributes {stable_mosaic.version = 11 : i64} {
  func.func @_channel_attention_kernel(%arg0: i32, %arg1: memref<2x128x128xf32, #tpu.memory_space<vmem>>, %arg2: memref<128x128xf32, #tpu.memory_space<vmem>>, %arg3: memref<128x128xf32, #tpu.memory_space<vmem>>, %arg4: memref<128x128xf32, #tpu.memory_space<vmem>>, %arg5: memref<3x128xf32, #tpu.memory_space<vmem>>, %arg6: memref<128x128xf32, #tpu.memory_space<vmem>>, %arg7: memref<1x128xf32, #tpu.memory_space<vmem>>, %arg8: memref<128x128xf32, #tpu.memory_space<vmem>>, %arg9: memref<2x128x128xf32, #tpu.memory_space<vmem>>) attributes {dimension_semantics = [#tpu.dimension_semantics<parallel>], iteration_bounds = array<i64: 2>, scalar_prefetch = 0 : i64, scratch_operands = 0 : i64, tpu.core_type = #tpu.core_type<tc>, window_params = [{transform_indices = @transform_0, window_bounds = array<i64: 2, 128, 128>}, {pipeline_mode = #tpu.pipeline_mode<synchronous>, transform_indices = @transform_1, window_bounds = array<i64: 128, 128>}, {pipeline_mode = #tpu.pipeline_mode<synchronous>, transform_indices = @transform_2, window_bounds = array<i64: 128, 128>}, {pipeline_mode = #tpu.pipeline_mode<synchronous>, transform_indices = @transform_3, window_bounds = array<i64: 128, 128>}, {pipeline_mode = #tpu.pipeline_mode<synchronous>, transform_indices = @transform_4, window_bounds = array<i64: 3, 128>}, {pipeline_mode = #tpu.pipeline_mode<synchronous>, transform_indices = @transform_5, window_bounds = array<i64: 128, 128>}, {pipeline_mode = #tpu.pipeline_mode<synchronous>, transform_indices = @transform_6, window_bounds = array<i64: 1, 128>}, {pipeline_mode = #tpu.pipeline_mode<synchronous>, transform_indices = @transform_7, window_bounds = array<i64: 128, 128>}, {transform_indices = @transform_8, window_bounds = array<i64: 2, 128, 128>}]} {
    %c0 = arith.constant 0 : index
    %c0_0 = arith.constant 0 : index
    %c0_1 = arith.constant 0 : index
    %0 = vector.load %arg1[%c0, %c0_0, %c0_1] : memref<2x128x128xf32, #tpu.memory_space<vmem>>, vector<2x128x128xf32>
    %1 = vector.shape_cast %0 : vector<2x128x128xf32> to vector<256x128xf32>
    %c0_2 = arith.constant 0 : index
    %c0_3 = arith.constant 0 : index
    %2 = vector.load %arg5[%c0_2, %c0_3] : memref<3x128xf32, #tpu.memory_space<vmem>>, vector<3x128xf32>
    %c0_4 = arith.constant 0 : index
    %c0_5 = arith.constant 0 : index
    %3 = vector.load %arg2[%c0_4, %c0_5] : memref<128x128xf32, #tpu.memory_space<vmem>>, vector<128x128xf32>
    %cst = arith.constant dense<0.000000e+00> : vector<256x128xf32>
    %4 = tpu.matmul %1, %3, %cst {dimension_numbers = #tpu.dot_dimension_numbers<[1], [0], [0], [1], [0, 0, 1, 1], [], []>} : vector<256x128xf32>, vector<128x128xf32>, vector<256x128xf32> -> vector<256x128xf32>
    %5 = vector.extract_strided_slice %2 {offsets = [0, 0], sizes = [1, 128], strides = [1, 1]} : vector<3x128xf32> to vector<1x128xf32>
    %6 = vector.broadcast %5 : vector<1x128xf32> to vector<256x128xf32>
    %7 = arith.addf %4, %6 : vector<256x128xf32>
    %c0_6 = arith.constant 0 : index
    %c0_7 = arith.constant 0 : index
    %8 = vector.load %arg3[%c0_6, %c0_7] : memref<128x128xf32, #tpu.memory_space<vmem>>, vector<128x128xf32>
    %cst_8 = arith.constant dense<0.000000e+00> : vector<256x128xf32>
    %9 = tpu.matmul %1, %8, %cst_8 {dimension_numbers = #tpu.dot_dimension_numbers<[1], [0], [0], [1], [0, 0, 1, 1], [], []>} : vector<256x128xf32>, vector<128x128xf32>, vector<256x128xf32> -> vector<256x128xf32>
    %10 = vector.extract_strided_slice %2 {offsets = [1, 0], sizes = [1, 128], strides = [1, 1]} : vector<3x128xf32> to vector<1x128xf32>
    %11 = vector.broadcast %10 : vector<1x128xf32> to vector<256x128xf32>
    %12 = arith.addf %9, %11 : vector<256x128xf32>
    %c0_9 = arith.constant 0 : index
    %c0_10 = arith.constant 0 : index
    %13 = vector.load %arg4[%c0_9, %c0_10] : memref<128x128xf32, #tpu.memory_space<vmem>>, vector<128x128xf32>
    %cst_11 = arith.constant dense<0.000000e+00> : vector<256x128xf32>
    %14 = tpu.matmul %1, %13, %cst_11 {dimension_numbers = #tpu.dot_dimension_numbers<[1], [0], [0], [1], [0, 0, 1, 1], [], []>} : vector<256x128xf32>, vector<128x128xf32>, vector<256x128xf32> -> vector<256x128xf32>
    %15 = vector.extract_strided_slice %2 {offsets = [2, 0], sizes = [1, 128], strides = [1, 1]} : vector<3x128xf32> to vector<1x128xf32>
    %16 = vector.broadcast %15 : vector<1x128xf32> to vector<256x128xf32>
    %17 = arith.addf %14, %16 : vector<256x128xf32>
    %cst_12 = arith.constant 2.500000e-01 : f32
    %18 = vector.broadcast %cst_12 : f32 to vector<256x128xf32>
    %19 = arith.mulf %12, %18 : vector<256x128xf32>
    %c0_13 = arith.constant 0 : index
    %c0_14 = arith.constant 0 : index
    %20 = vector.load %arg8[%c0_13, %c0_14] : memref<128x128xf32, #tpu.memory_space<vmem>>, vector<128x128xf32>
    %21 = vector.extract_strided_slice %7 {offsets = [0, 0], sizes = [128, 128], strides = [1, 1]} : vector<256x128xf32> to vector<128x128xf32>
    %22 = vector.extract_strided_slice %19 {offsets = [0, 0], sizes = [128, 128], strides = [1, 1]} : vector<256x128xf32> to vector<128x128xf32>
    %23 = vector.extract_strided_slice %17 {offsets = [0, 0], sizes = [128, 128], strides = [1, 1]} : vector<256x128xf32> to vector<128x128xf32>
    %cst_15 = arith.constant dense<0.000000e+00> : vector<128x128xf32>
    %24 = tpu.matmul %22, %23, %cst_15 {dimension_numbers = #tpu.dot_dimension_numbers<[0], [0], [1], [1], [0, 1, 1, 1], [], []>} : vector<128x128xf32>, vector<128x128xf32>, vector<128x128xf32> -> vector<128x128xf32>
    %25 = arith.addf %24, %20 : vector<128x128xf32>
    %cst_16 = arith.constant dense<0xFF800000> : vector<128xf32>
    %26 = vector.multi_reduction <maximumf>, %25, %cst_16 [1] : vector<128x128xf32> to vector<128xf32>
    %27 = vector.shape_cast %26 : vector<128xf32> to vector<128x1xf32>
    %28 = vector.broadcast %27 : vector<128x1xf32> to vector<128x128xf32>
    %29 = arith.subf %25, %28 : vector<128x128xf32>
    %30 = math.exp %29 : vector<128x128xf32>
    %cst_17 = arith.constant dense<0.000000e+00> : vector<128xf32>
    %31 = vector.multi_reduction <add>, %30, %cst_17 [1] : vector<128x128xf32> to vector<128xf32>
    %32 = vector.shape_cast %31 : vector<128xf32> to vector<128x1xf32>
    %33 = vector.broadcast %32 : vector<128x1xf32> to vector<128x128xf32>
    %34 = arith.divf %30, %33 : vector<128x128xf32>
    %cst_18 = arith.constant dense<0.000000e+00> : vector<128x128xf32>
    %35 = tpu.matmul %21, %34, %cst_18 {dimension_numbers = #tpu.dot_dimension_numbers<[1], [1], [0], [0], [0, 0, 1, 0], [], []>} : vector<128x128xf32>, vector<128x128xf32>, vector<128x128xf32> -> vector<128x128xf32>
    %36 = vector.extract_strided_slice %7 {offsets = [128, 0], sizes = [128, 128], strides = [1, 1]} : vector<256x128xf32> to vector<128x128xf32>
    %37 = vector.extract_strided_slice %19 {offsets = [128, 0], sizes = [128, 128], strides = [1, 1]} : vector<256x128xf32> to vector<128x128xf32>
    %38 = vector.extract_strided_slice %17 {offsets = [128, 0], sizes = [128, 128], strides = [1, 1]} : vector<256x128xf32> to vector<128x128xf32>
    %cst_19 = arith.constant dense<0.000000e+00> : vector<128x128xf32>
    %39 = tpu.matmul %37, %38, %cst_19 {dimension_numbers = #tpu.dot_dimension_numbers<[0], [0], [1], [1], [0, 1, 1, 1], [], []>} : vector<128x128xf32>, vector<128x128xf32>, vector<128x128xf32> -> vector<128x128xf32>
    %40 = arith.addf %39, %20 : vector<128x128xf32>
    %cst_20 = arith.constant dense<0xFF800000> : vector<128xf32>
    %41 = vector.multi_reduction <maximumf>, %40, %cst_20 [1] : vector<128x128xf32> to vector<128xf32>
    %42 = vector.shape_cast %41 : vector<128xf32> to vector<128x1xf32>
    %43 = vector.broadcast %42 : vector<128x1xf32> to vector<128x128xf32>
    %44 = arith.subf %40, %43 : vector<128x128xf32>
    %45 = math.exp %44 : vector<128x128xf32>
    %cst_21 = arith.constant dense<0.000000e+00> : vector<128xf32>
    %46 = vector.multi_reduction <add>, %45, %cst_21 [1] : vector<128x128xf32> to vector<128xf32>
    %47 = vector.shape_cast %46 : vector<128xf32> to vector<128x1xf32>
    %48 = vector.broadcast %47 : vector<128x1xf32> to vector<128x128xf32>
    %49 = arith.divf %45, %48 : vector<128x128xf32>
    %cst_22 = arith.constant dense<0.000000e+00> : vector<128x128xf32>
    %50 = tpu.matmul %36, %49, %cst_22 {dimension_numbers = #tpu.dot_dimension_numbers<[1], [1], [0], [0], [0, 0, 1, 0], [], []>} : vector<128x128xf32>, vector<128x128xf32>, vector<128x128xf32> -> vector<128x128xf32>
    %51 = tpu.concatenate %35, %50 in 0 : vector<128x128xf32>, vector<128x128xf32> -> vector<256x128xf32>
    %c0_23 = arith.constant 0 : index
    %c0_24 = arith.constant 0 : index
    %52 = vector.load %arg6[%c0_23, %c0_24] : memref<128x128xf32, #tpu.memory_space<vmem>>, vector<128x128xf32>
    %cst_25 = arith.constant dense<0.000000e+00> : vector<256x128xf32>
    %53 = tpu.matmul %51, %52, %cst_25 {dimension_numbers = #tpu.dot_dimension_numbers<[1], [0], [0], [1], [0, 0, 1, 1], [], []>} : vector<256x128xf32>, vector<128x128xf32>, vector<256x128xf32> -> vector<256x128xf32>
    %c0_26 = arith.constant 0 : index
    %c0_27 = arith.constant 0 : index
    %54 = vector.load %arg7[%c0_26, %c0_27] : memref<1x128xf32, #tpu.memory_space<vmem>>, vector<1x128xf32>
    %55 = vector.broadcast %54 : vector<1x128xf32> to vector<256x128xf32>
    %56 = arith.addf %53, %55 : vector<256x128xf32>
    %57 = vector.shape_cast %56 : vector<256x128xf32> to vector<2x128x128xf32>
    %c0_28 = arith.constant 0 : index
    %c0_29 = arith.constant 0 : index
    %c0_30 = arith.constant 0 : index
    %58 = vector.load %arg9[%c0_28, %c0_29, %c0_30] : memref<2x128x128xf32, #tpu.memory_space<vmem>>, vector<2x128x128xf32>
    tpu.vector_store %arg9[%c0_28, %c0_29, %c0_30], %57 {strides = array<i32>} : memref<2x128x128xf32, #tpu.memory_space<vmem>>, vector<2x128x128xf32>,
    return
  }
  func.func @transform_0(%arg0: i32) -> (i32, i32, i32) {
    %c0_i32 = arith.constant 0 : i32
    %c0_i32_0 = arith.constant 0 : i32
    %c0_i32_1 = arith.constant 0 : i32
    return %arg0, %c0_i32, %c0_i32_0 : i32, i32, i32
  }
  func.func @transform_1(%arg0: i32) -> (i32, i32) {
    %c0_i32 = arith.constant 0 : i32
    %c0_i32_0 = arith.constant 0 : i32
    %c0_i32_1 = arith.constant 0 : i32
    return %c0_i32, %c0_i32_0 : i32, i32
  }
  func.func @transform_2(%arg0: i32) -> (i32, i32) {
    %c0_i32 = arith.constant 0 : i32
    %c0_i32_0 = arith.constant 0 : i32
    %c0_i32_1 = arith.constant 0 : i32
    return %c0_i32, %c0_i32_0 : i32, i32
  }
  func.func @transform_3(%arg0: i32) -> (i32, i32) {
    %c0_i32 = arith.constant 0 : i32
    %c0_i32_0 = arith.constant 0 : i32
    %c0_i32_1 = arith.constant 0 : i32
    return %c0_i32, %c0_i32_0 : i32, i32
  }
  func.func @transform_4(%arg0: i32) -> (i32, i32) {
    %c0_i32 = arith.constant 0 : i32
    %c0_i32_0 = arith.constant 0 : i32
    %c0_i32_1 = arith.constant 0 : i32
    return %c0_i32, %c0_i32_0 : i32, i32
  }
  func.func @transform_5(%arg0: i32) -> (i32, i32) {
    %c0_i32 = arith.constant 0 : i32
    %c0_i32_0 = arith.constant 0 : i32
    %c0_i32_1 = arith.constant 0 : i32
    return %c0_i32, %c0_i32_0 : i32, i32
  }
  func.func @transform_6(%arg0: i32) -> (i32, i32) {
    %c0_i32 = arith.constant 0 : i32
    %c0_i32_0 = arith.constant 0 : i32
    %c0_i32_1 = arith.constant 0 : i32
    return %c0_i32, %c0_i32_0 : i32, i32
  }
  func.func @transform_7(%arg0: i32) -> (i32, i32) {
    %c0_i32 = arith.constant 0 : i32
    %c0_i32_0 = arith.constant 0 : i32
    %c0_i32_1 = arith.constant 0 : i32
    return %c0_i32, %c0_i32_0 : i32, i32
  }
  func.func @transform_8(%arg0: i32) -> (i32, i32, i32) {
    %c0_i32 = arith.constant 0 : i32
    %c0_i32_0 = arith.constant 0 : i32
    %c0_i32_1 = arith.constant 0 : i32
    return %arg0, %c0_i32, %c0_i32_0 : i32, i32, i32
  }
}

</mosaic_0001>

<llo_original>
// kernel: tpu_custom_call.1
$region0: #{tpu_custom_call.1}
  #allocation0 [shape = 'u32[]', space=smem, size = 0x4, offset = 0x4, fixed_abs, tag = 'smem constant byte address 0x4 - core index']
  #allocation1 [shape = 'u32[72,128]{1,0:T(1,128)}', space=vmem, size = 0x9000, scoped, tag = 'internal scratch']
  %s0 = inlined_call_operand.hbm [shape: f32[4,128,128], index: 0, kind: input, shape index: {}]
  %s1 = inlined_call_operand.hbm [shape: f32[128,128], index: 1, kind: input, shape index: {}]
  %s2 = inlined_call_operand.hbm [shape: f32[128,128], index: 2, kind: input, shape index: {}]
  %s3 = inlined_call_operand.hbm [shape: f32[128,128], index: 3, kind: input, shape index: {}]
  %s4 = inlined_call_operand.hbm [shape: f32[3,128], index: 4, kind: input, shape index: {}]
  %s5 = inlined_call_operand.hbm [shape: f32[128,128], index: 5, kind: input, shape index: {}]
  %s6 = inlined_call_operand.vmem [shape: f32[1,128], index: 6, kind: input, shape index: {}]
  %s7 = inlined_call_operand.hbm [shape: f32[128,128], index: 7, kind: input, shape index: {}]
  %s8 = inlined_call_operand.hbm [shape: f32[4,128,128], index: 8, kind: output, shape index: {}]
  %s9 = sld [smem:[#allocation0]]
  $region93: #{tpu_custom_call.1} parent=0
    _
  %s11 = ssub.s32 1, %s9
  %s12 = scalar_select 0, %s11, %s9
  $region1: #{tpu_custom_call.1} parent=0
    #allocation2 [shape = 'u8[262144]{0}', space=vmem, size = 0x40000, scoped, tag = 'input window, operand 0']
    #allocation3 [shape = 's32[2]{0}', space=sflag, size = 0x8, scoped, tag = 'scoped memory for tpu_custom_call.1']
    #allocation4 [shape = 's32[2]{0}', space=sflag, size = 0x8, scoped, tag = 'scoped memory for tpu_custom_call.1']
    #allocation5 [shape = 'u8[65536]{0}', space=vmem, size = 0x10000, scoped, tag = 'input window, operand 1, single buffered']
    #allocation6 [shape = 's32[1]{0}', space=sflag, size = 0x4, scoped, tag = 'scoped memory for tpu_custom_call.1']
    #allocation7 [shape = 'u8[65536]{0}', space=vmem, size = 0x10000, scoped, tag = 'input window, operand 2, single buffered']
    #allocation8 [shape = 'u8[65536]{0}', space=vmem, size = 0x10000, scoped, tag = 'input window, operand 3, single buffered']
    #allocation9 [shape = 's32[1]{0}', space=sflag, size = 0x4, scoped, tag = 'scoped memory for tpu_custom_call.1']
    #allocation10 [shape = 'u8[2048]{0}', space=vmem, size = 0x800, scoped, tag = 'input window, operand 4, single buffered']
    #allocation11 [shape = 'u8[65536]{0}', space=vmem, size = 0x10000, scoped, tag = 'input window, operand 5, single buffered']
    #allocation12 [shape = 's32[1]{0}', space=sflag, size = 0x4, scoped, tag = 'scoped memory for tpu_custom_call.1']
    #allocation13 [shape = 'u8[65536]{0}', space=vmem, size = 0x10000, scoped, tag = 'input window, operand 7, single buffered']
    #allocation14 [shape = 'u8[262144]{0}', space=vmem, size = 0x40000, scoped, tag = 'output window, operand 0']
    %13 = vsyncpa [#allocation3], 0
    %s14 = scalar_lea.sflag [#allocation3], 1
    %15 = vsyncpa %s14, 0
    %16 = vsyncpa [#allocation6], 0
    %17 = vsyncpa [#allocation9], 0
    %18 = vsyncpa [#allocation12], 0
    %19 = vsyncpa [#allocation4], 0
    %s20 = scalar_lea.sflag [#allocation4], 1
    %21 = vsyncpa %s20, 0
    loop: start=0, step=1, limit=4
    $region2: #{tpu_custom_call.1} parent=1 // loop_pre_header
      _
    $region3: #{tpu_custom_call.1} parent=1 // loop_header
      %s23 = sphi 0, %s27
      %p24 = scmp.ge.s32.totalorder %s23, 4
      %s33 = sphi 0, %s35
      %s36 = sphi 0, %s33
      %s37 = sphi 0, %s36
      %s53 = sphi 0, %s37
      %s57 = sphi 0, %s57
      %s59 = sphi 0, %s57
      %s60 = sphi 0, %s59
      %s74 = sphi 0, %s60
      %s78 = sphi 0, %s78
      %s80 = sphi 0, %s78
      %s81 = sphi 0, %s80
      %s95 = sphi 0, %s81
      %s99 = sphi 0, %s99
      %s101 = sphi 0, %s99
      %s102 = sphi 0, %s101
      %s116 = sphi 0, %s102
      %s120 = sphi 0, %s120
      %s122 = sphi 0, %s120
      %s123 = sphi 0, %s122
      %s137 = sphi 0, %s123
      %s141 = sphi 0, %s141
      %s143 = sphi 0, %s141
      %s144 = sphi 0, %s143
      %s158 = sphi 0, %s144
      %s162 = sphi 0, %s162
      %s164 = sphi 0, %s162
      %s165 = sphi 0, %s164
      %s179 = sphi 0, %s165
      %s183 = sphi 0, %s183
      %s185 = sphi 0, %s183
      %s186 = sphi 0, %s185
      %s200 = sphi 0, %s186
      %s206 = sphi 0, %s208
      %s209 = sphi 0, %s206
      %s210 = sphi 0, %s209
      %s226 = sphi 0, %s210
    $region4: #{tpu_custom_call.1} parent=1 // loop_header_branch
      %26 = sbr.rel (%p24) target = $region8
    $region5: #{tpu_custom_call.1} parent=1 // loop_body
      %s28 = ssub.s32 %s23, 1
      %s29 = ssub.s32 %s23, 2
      %s30 = sadd.s32 %s23, 1
      %s31 = ssub.s32 %s23, %s30
      %p32 = scmp.eq.s32.totalorder %s31, 0
      %s34 = sadd.s32 %s33, 1
      %s35 = scalar_select %p32, %s33, %s34
      %p38 = pneg %p32
      %p39 = scmp.eq.s32.totalorder %s23, 1
      %p40 = por %p38, %p39
      %p41 = scmp.ne.s32.totalorder %s33, %s36
      %p42 = scmp.eq.s32.totalorder %s23, 0
      %p43 = por %p41, %p42
      %p44 = scmp.ne.s32.totalorder %s33, %s36
      %p45 = scmp.eq.s32.totalorder %s28, 1
      %p46 = por %p44, %p45
      %p47 = scmp.ne.s32.totalorder %s36, %s37
      %p48 = scmp.eq.s32.totalorder %s28, 0
      %p49 = por %p47, %p48
      %p50 = scmp.ne.s32.totalorder %s36, %s37
      %p51 = scmp.eq.s32.totalorder %s29, 1
      %p52 = por %p50, %p51
      %p54 = scmp.ne.s32.totalorder %s37, %s53
      %p55 = scmp.eq.s32.totalorder %s29, 0
      %p56 = por %p54, %p55
      %s58 = sadd.s32 %s57, 1
      %p61 = scmp.eq.s32.totalorder %s23, 1
      %p62 = scmp.ne.s32.totalorder %s57, %s59
      %p63 = scmp.eq.s32.totalorder %s23, 0
      %p64 = por %p62, %p63
      %p65 = scmp.ne.s32.totalorder %s57, %s59
      %p66 = scmp.eq.s32.totalorder %s28, 1
      %p67 = por %p65, %p66
      %p68 = scmp.ne.s32.totalorder %s59, %s60
      %p69 = scmp.eq.s32.totalorder %s28, 0
      %p70 = por %p68, %p69
      %p71 = scmp.ne.s32.totalorder %s59, %s60
      %p72 = scmp.eq.s32.totalorder %s29, 1
      %p73 = por %p71, %p72
      %p75 = scmp.ne.s32.totalorder %s60, %s74
      %p76 = scmp.eq.s32.totalorder %s29, 0
      %p77 = por %p75, %p76
      %s79 = sadd.s32 %s78, 1
      %p82 = scmp.eq.s32.totalorder %s23, 1
      %p83 = scmp.ne.s32.totalorder %s78, %s80
      %p84 = scmp.eq.s32.totalorder %s23, 0
      %p85 = por %p83, %p84
      %p86 = scmp.ne.s32.totalorder %s78, %s80
      %p87 = scmp.eq.s32.totalorder %s28, 1
      %p88 = por %p86, %p87
      %p89 = scmp.ne.s32.totalorder %s80, %s81
      %p90 = scmp.eq.s32.totalorder %s28, 0
      %p91 = por %p89, %p90
      %p92 = scmp.ne.s32.totalorder %s80, %s81
      %p93 = scmp.eq.s32.totalorder %s29, 1
      %p94 = por %p92, %p93
      %p96 = scmp.ne.s32.totalorder %s81, %s95
      %p97 = scmp.eq.s32.totalorder %s29, 0
      %p98 = por %p96, %p97
      %s100 = sadd.s32 %s99, 1
      %p103 = scmp.eq.s32.totalorder %s23, 1
      %p104 = scmp.ne.s32.totalorder %s99, %s101
      %p105 = scmp.eq.s32.totalorder %s23, 0
      %p106 = por %p104, %p105
      %p107 = scmp.ne.s32.totalorder %s99, %s101
      %p108 = scmp.eq.s32.totalorder %s28, 1
      %p109 = por %p107, %p108
      %p110 = scmp.ne.s32.totalorder %s101, %s102
      %p111 = scmp.eq.s32.totalorder %s28, 0
      %p112 = por %p110, %p111
      %p113 = scmp.ne.s32.totalorder %s101, %s102
      %p114 = scmp.eq.s32.totalorder %s29, 1
      %p115 = por %p113, %p114
      %p117 = scmp.ne.s32.totalorder %s102, %s116
      %p118 = scmp.eq.s32.totalorder %s29, 0
      %p119 = por %p117, %p118
      %s121 = sadd.s32 %s120, 1
      %p124 = scmp.eq.s32.totalorder %s23, 1
      %p125 = scmp.ne.s32.totalorder %s120, %s122
      %p126 = scmp.eq.s32.totalorder %s23, 0
      %p127 = por %p125, %p126
      %p128 = scmp.ne.s32.totalorder %s120, %s122
      %p129 = scmp.eq.s32.totalorder %s28, 1
      %p130 = por %p128, %p129
      %p131 = scmp.ne.s32.totalorder %s122, %s123
      %p132 = scmp.eq.s32.totalorder %s28, 0
      %p133 = por %p131, %p132
      %p134 = scmp.ne.s32.totalorder %s122, %s123
      %p135 = scmp.eq.s32.totalorder %s29, 1
      %p136 = por %p134, %p135
      %p138 = scmp.ne.s32.totalorder %s123, %s137
      %p139 = scmp.eq.s32.totalorder %s29, 0
      %p140 = por %p138, %p139
      %s142 = sadd.s32 %s141, 1
      %p145 = scmp.eq.s32.totalorder %s23, 1
      %p146 = scmp.ne.s32.totalorder %s141, %s143
      %p147 = scmp.eq.s32.totalorder %s23, 0
      %p148 = por %p146, %p147
      %p149 = scmp.ne.s32.totalorder %s141, %s143
      %p150 = scmp.eq.s32.totalorder %s28, 1
      %p151 = por %p149, %p150
      %p152 = scmp.ne.s32.totalorder %s143, %s144
      %p153 = scmp.eq.s32.totalorder %s28, 0
      %p154 = por %p152, %p153
      %p155 = scmp.ne.s32.totalorder %s143, %s144
      %p156 = scmp.eq.s32.totalorder %s29, 1
      %p157 = por %p155, %p156
      %p159 = scmp.ne.s32.totalorder %s144, %s158
      %p160 = scmp.eq.s32.totalorder %s29, 0
      %p161 = por %p159, %p160
      %s163 = sadd.s32 %s162, 1
      %p166 = scmp.eq.s32.totalorder %s23, 1
      %p167 = scmp.ne.s32.totalorder %s162, %s164
      %p168 = scmp.eq.s32.totalorder %s23, 0
      %p169 = por %p167, %p168
      %p170 = scmp.ne.s32.totalorder %s162, %s164
      %p171 = scmp.eq.s32.totalorder %s28, 1
      %p172 = por %p170, %p171
      %p173 = scmp.ne.s32.totalorder %s164, %s165
      %p174 = scmp.eq.s32.totalorder %s28, 0
      %p175 = por %p173, %p174
      %p176 = scmp.ne.s32.totalorder %s164, %s165
      %p177 = scmp.eq.s32.totalorder %s29, 1
      %p178 = por %p176, %p177
      %p180 = scmp.ne.s32.totalorder %s165, %s179
      %p181 = scmp.eq.s32.totalorder %s29, 0
      %p182 = por %p180, %p181
      %s184 = sadd.s32 %s183, 1
      %p187 = scmp.eq.s32.totalorder %s23, 1
      %p188 = scmp.ne.s32.totalorder %s183, %s185
      %p189 = scmp.eq.s32.totalorder %s23, 0
      %p190 = por %p188, %p189
      %p191 = scmp.ne.s32.totalorder %s183, %s185
      %p192 = scmp.eq.s32.totalorder %s28, 1
      %p193 = por %p191, %p192
      %p194 = scmp.ne.s32.totalorder %s185, %s186
      %p195 = scmp.eq.s32.totalorder %s28, 0
      %p196 = por %p194, %p195
      %p197 = scmp.ne.s32.totalorder %s185, %s186
      %p198 = scmp.eq.s32.totalorder %s29, 1
      %p199 = por %p197, %p198
      %p201 = scmp.ne.s32.totalorder %s186, %s200
      %p202 = scmp.eq.s32.totalorder %s29, 0
      %p203 = por %p201, %p202
      %s204 = ssub.s32 %s23, %s30
      %p205 = scmp.eq.s32.totalorder %s204, 0
      %s207 = sadd.s32 %s206, 1
      %s208 = scalar_select %p205, %s206, %s207
      %p211 = pneg %p205
      %p212 = scmp.eq.s32.totalorder %s23, 1
      %p213 = por %p211, %p212
      %p214 = scmp.ne.s32.totalorder %s206, %s209
      %p215 = scmp.eq.s32.totalorder %s23, 0
      %p216 = por %p214, %p215
      %p217 = scmp.ne.s32.totalorder %s206, %s209
      %p218 = scmp.eq.s32.totalorder %s28, 1
      %p219 = por %p217, %p218
      %p220 = scmp.ne.s32.totalorder %s209, %s210
      %p221 = scmp.eq.s32.totalorder %s28, 0
      %p222 = por %p220, %p221
      %p223 = scmp.ne.s32.totalorder %s209, %s210
      %p224 = scmp.eq.s32.totalorder %s29, 1
      %p225 = por %p223, %p224
      %p227 = scmp.ne.s32.totalorder %s210, %s226
      %p228 = scmp.eq.s32.totalorder %s29, 0
      %p229 = por %p227, %p228
      %p230 = scmp.le.s32.totalorder 1, %s23
      %p231 = scmp.lt.s32.totalorder %s23, 3
      %p232 = pnand %p230, %p231
      %p233 = pneg %p232
      // Predicated region
      $region9: #{tpu_custom_call.1} parent=5 // pred_check
        _
      $region10: #{tpu_custom_call.1} parent=5 // pred_check_branch
        %235 = sbr.rel (%p232) target = $region12
      $region11: #{tpu_custom_call.1} parent=5 // pred_region
        %s236 = ssub.s32 %s23, 1
        // Predicated region
        $region13: #{tpu_custom_call.1} parent=11 // pred_check
          %p237 = pneg %p70
        $region14: #{tpu_custom_call.1} parent=11 // pred_check_branch
          %239 = sbr.rel (%p237) target = $region16
        $region15: #{tpu_custom_call.1} parent=11 // pred_region
          %241 = vsyncadd [#allocation6], 0
          %s242 = sshll.u32 %s1, 4
          %s243 = int_to_ptr.hbm [resolvable:$true] %s242
          %s244 = sshll.u32 [#allocation5], 4
          %s245 = int_to_ptr.vmem [resolvable:$true] %s244
          %250 = dma.hbm_to_vmem [thread:$0]  %s243, 2048, %s245, [#allocation6], 128, 128, 8
        $region16: #{tpu_custom_call.1} parent=11 // pred_fallthru
          _
        // Predicated region
        $region17: #{tpu_custom_call.1} parent=11 // pred_check
          %p251 = pneg %p91
        $region18: #{tpu_custom_call.1} parent=11 // pred_check_branch
          %253 = sbr.rel (%p251) target = $region20
        $region19: #{tpu_custom_call.1} parent=11 // pred_region
          %255 = vsyncadd [#allocation6], 0
          %s256 = sshll.u32 %s2, 4
          %s257 = int_to_ptr.hbm [resolvable:$true] %s256
          %s258 = sshll.u32 [#allocation7], 4
          %s259 = int_to_ptr.vmem [resolvable:$true] %s258
          %264 = dma.hbm_to_vmem [thread:$0]  %s257, 2048, %s259, [#allocation6], 128, 128, 8
        $region20: #{tpu_custom_call.1} parent=11 // pred_fallthru
          _
        // Predicated region
        $region21: #{tpu_custom_call.1} parent=11 // pred_check
          %p265 = pneg %p112
        $region22: #{tpu_custom_call.1} parent=11 // pred_check_branch
          %267 = sbr.rel (%p265) target = $region24
        $region23: #{tpu_custom_call.1} parent=11 // pred_region
          %269 = vsyncadd [#allocation9], 0
          %s270 = sshll.u32 %s3, 4
          %s271 = int_to_ptr.hbm [resolvable:$true] %s270
          %s272 = sshll.u32 [#allocation8], 4
          %s273 = int_to_ptr.vmem [resolvable:$true] %s272
          %278 = dma.hbm_to_vmem [thread:$0]  %s271, 2048, %s273, [#allocation9], 128, 128, 8
        $region24: #{tpu_custom_call.1} parent=11 // pred_fallthru
          _
        // Predicated region
        $region25: #{tpu_custom_call.1} parent=11 // pred_check
          %p279 = pneg %p133
        $region26: #{tpu_custom_call.1} parent=11 // pred_check_branch
          %281 = sbr.rel (%p279) target = $region28
        $region27: #{tpu_custom_call.1} parent=11 // pred_region
          %283 = vsyncadd [#allocation9], 0
          %s285 = sshll.u32 %s4, 4
          %s286 = int_to_ptr.hbm [resolvable:$true] %s285
          %s287 = sshll.u32 [#allocation10], 4
          %s288 = int_to_ptr.vmem [resolvable:$true] %s287
          %290 = dma.hbm_to_vmem [thread:$0]  %s286, 64, %s288, [#allocation9]
        $region28: #{tpu_custom_call.1} parent=11 // pred_fallthru
          _
        // Predicated region
        $region29: #{tpu_custom_call.1} parent=11 // pred_check
          %p291 = pneg %p154
        $region30: #{tpu_custom_call.1} parent=11 // pred_check_branch
          %293 = sbr.rel (%p291) target = $region32
        $region31: #{tpu_custom_call.1} parent=11 // pred_region
          %295 = vsyncadd [#allocation12], 0
          %s296 = sshll.u32 %s5, 4
          %s297 = int_to_ptr.hbm [resolvable:$true] %s296
          %s298 = sshll.u32 [#allocation11], 4
          %s299 = int_to_ptr.vmem [resolvable:$true] %s298
          %304 = dma.hbm_to_vmem [thread:$0]  %s297, 2048, %s299, [#allocation12], 128, 128, 8
        $region32: #{tpu_custom_call.1} parent=11 // pred_fallthru
          _
        // Predicated region
        $region33: #{tpu_custom_call.1} parent=11 // pred_check
          %p305 = pneg %p175
        $region34: #{tpu_custom_call.1} parent=11 // pred_check_branch
          %307 = sbr.rel (%p305) target = $region36
        $region35: #{tpu_custom_call.1} parent=11 // pred_region
          _
        $region36: #{tpu_custom_call.1} parent=11 // pred_fallthru
          _
        // Predicated region
        $region37: #{tpu_custom_call.1} parent=11 // pred_check
          %p308 = pneg %p196
        $region38: #{tpu_custom_call.1} parent=11 // pred_check_branch
          %310 = sbr.rel (%p308) target = $region40
        $region39: #{tpu_custom_call.1} parent=11 // pred_region
          %312 = vsyncadd [#allocation12], 0
          %s313 = sshll.u32 %s7, 4
          %s314 = int_to_ptr.hbm [resolvable:$true] %s313
          %s315 = sshll.u32 [#allocation13], 4
          %s316 = int_to_ptr.vmem [resolvable:$true] %s315
          %321 = dma.hbm_to_vmem [thread:$0]  %s314, 2048, %s316, [#allocation12], 128, 128, 8
        $region40: #{tpu_custom_call.1} parent=11 // pred_fallthru
          _
      $region12: #{tpu_custom_call.1} parent=5 // pred_fallthru
        _
      %p322 = scmp.lt.s32.totalorder %s23, 2
      // Predicated region
      $region41: #{tpu_custom_call.1} parent=5 // pred_check
        %p323 = pneg %p322
      $region42: #{tpu_custom_call.1} parent=5 // pred_check_branch
        %325 = sbr.rel (%p323) target = $region44
      $region43: #{tpu_custom_call.1} parent=5 // pred_region
        // Predicated region
        $region45: #{tpu_custom_call.1} parent=43 // pred_check
          %p326 = pneg %p43
        $region46: #{tpu_custom_call.1} parent=43 // pred_check_branch
          %328 = sbr.rel (%p326) target = $region48
        $region47: #{tpu_custom_call.1} parent=43 // pred_region
          %s329 = sand.u32 %s33, 1
          %s330 = scalar_lea.sflag [#allocation3], %s329
          %s331 = sand.u32 %s33, 1
          %s332 = smul.addr %s331, 256
          %s333 = scalar_lea.vmem [#allocation2], %s332
          %s334 = smul.u32 2, %s23
          %336 = vsyncadd %s330, 0
          %s337 = smul.addr %s334, 16
          %s338 = smul.addr %s337, 8
          %s339 = scalar_lea.hbm %s0, %s338
          %s340 = sshll.u32 %s339, 4
          %s341 = int_to_ptr.hbm [resolvable:$true] %s340
          %s342 = sshll.u32 %s333, 4
          %s343 = int_to_ptr.vmem [resolvable:$true] %s342
          %348 = dma.hbm_to_vmem [thread:$0]  %s341, 4096, %s343, %s330, 128, 128, 8
        $region48: #{tpu_custom_call.1} parent=43 // pred_fallthru
          _
      $region44: #{tpu_custom_call.1} parent=5 // pred_fallthru
        _
      %p349 = scmp.le.s32.totalorder 1, %s23
      %p350 = scmp.lt.s32.totalorder %s23, 3
      %p351 = pnand %p349, %p350
      %p352 = pneg %p351
      // Predicated region
      $region49: #{tpu_custom_call.1} parent=5 // pred_check
        _
      $region50: #{tpu_custom_call.1} parent=5 // pred_check_branch
        %354 = sbr.rel (%p351) target = $region52
      $region51: #{tpu_custom_call.1} parent=5 // pred_region
        %s355 = ssub.s32 %s23, 1
        %s356 = sand.u32 %s36, 1
        %s357 = scalar_lea.sflag [#allocation3], %s356
        %s358 = sand.u32 %s36, 1
        %s359 = smul.addr %s358, 256
        %s360 = scalar_lea.vmem [#allocation2], %s359
        // Predicated region
        $region53: #{tpu_custom_call.1} parent=51 // pred_check
          %p361 = pneg %p49
        $region54: #{tpu_custom_call.1} parent=51 // pred_check_branch
          %363 = sbr.rel (%p361) target = $region56
        $region55: #{tpu_custom_call.1} parent=51 // pred_region
          %365 = dma.done %s357, 4096
        $region56: #{tpu_custom_call.1} parent=51 // pred_fallthru
          _
        // Predicated region
        $region57: #{tpu_custom_call.1} parent=51 // pred_check
          %p366 = pneg %p70
        $region58: #{tpu_custom_call.1} parent=51 // pred_check_branch
          %368 = sbr.rel (%p366) target = $region60
        $region59: #{tpu_custom_call.1} parent=51 // pred_region
          %370 = dma.done [#allocation6], 2048
        $region60: #{tpu_custom_call.1} parent=51 // pred_fallthru
          _
        // Predicated region
        $region61: #{tpu_custom_call.1} parent=51 // pred_check
          %p371 = pneg %p91
        $region62: #{tpu_custom_call.1} parent=51 // pred_check_branch
          %373 = sbr.rel (%p371) target = $region64
        $region63: #{tpu_custom_call.1} parent=51 // pred_region
          %375 = dma.done [#allocation6], 2048
        $region64: #{tpu_custom_call.1} parent=51 // pred_fallthru
          _
        // Predicated region
        $region65: #{tpu_custom_call.1} parent=51 // pred_check
          %p376 = pneg %p112
        $region66: #{tpu_custom_call.1} parent=51 // pred_check_branch
          %378 = sbr.rel (%p376) target = $region68
        $region67: #{tpu_custom_call.1} parent=51 // pred_region
          %380 = dma.done [#allocation9], 2048
        $region68: #{tpu_custom_call.1} parent=51 // pred_fallthru
          _
        // Predicated region
        $region69: #{tpu_custom_call.1} parent=51 // pred_check
          %p381 = pneg %p133
        $region70: #{tpu_custom_call.1} parent=51 // pred_check_branch
          %383 = sbr.rel (%p381) target = $region72
        $region71: #{tpu_custom_call.1} parent=51 // pred_region
          %385 = dma.done [#allocation9], 64
        $region72: #{tpu_custom_call.1} parent=51 // pred_fallthru
          _
        // Predicated region
        $region73: #{tpu_custom_call.1} parent=51 // pred_check
          %p386 = pneg %p154
        $region74: #{tpu_custom_call.1} parent=51 // pred_check_branch
          %388 = sbr.rel (%p386) target = $region76
        $region75: #{tpu_custom_call.1} parent=51 // pred_region
          %390 = dma.done [#allocation12], 2048
        $region76: #{tpu_custom_call.1} parent=51 // pred_fallthru
          _
        // Predicated region
        $region77: #{tpu_custom_call.1} parent=51 // pred_check
          %p391 = pneg %p196
        $region78: #{tpu_custom_call.1} parent=51 // pred_check_branch
          %393 = sbr.rel (%p391) target = $region80
        $region79: #{tpu_custom_call.1} parent=51 // pred_region
          %395 = dma.done [#allocation12], 2048
        $region80: #{tpu_custom_call.1} parent=51 // pred_fallthru
          _
        %s396 = sand.u32 %s36, 1
        %s397 = scalar_lea.sflag [#allocation3], %s396
        %s398 = sand.u32 %s36, 1
        %s399 = smul.addr %s398, 256
        %s400 = scalar_lea.vmem [#allocation2], %s399
        %p401 = pneg %p49
        %p402 = pneg %p46
        %p403 = pneg %p70
        %p404 = pneg %p67
        %p405 = pneg %p91
        %p406 = pneg %p88
        %p407 = pneg %p112
        %p408 = pneg %p109
        %p409 = pneg %p133
        %p410 = pneg %p130
        %p411 = pneg %p154
        %p412 = pneg %p151
        %p413 = pneg %p175
        %p414 = pneg %p172
        %p415 = pneg %p196
        %p416 = pneg %p193
        %p417 = pneg %p222
        %p418 = pneg %p219
        %s419 = sand.u32 %s209, 1
        %s420 = scalar_lea.sflag [#allocation4], %s419
        %s421 = sand.u32 %s209, 1
        %s422 = smul.addr %s421, 256
        %s423 = scalar_lea.vmem [#allocation14], %s422
        %s424 = smul.u32 2, %s28
        %s425 = smul.u32 2, %s28
        %v426 = vld [vmem:[%s360] sm:$0xff]
        %v427 = vld [vmem:[%s360 + $0x8] sm:$0xff]
        %v428 = vld [vmem:[%s360 + $0x10] sm:$0xff]
        %v429 = vld [vmem:[%s360 + $0x18] sm:$0xff]
        %v430 = vld [vmem:[%s360 + $0x20] sm:$0xff]
        %v431 = vld [vmem:[%s360 + $0x28] sm:$0xff]
        %v432 = vld [vmem:[%s360 + $0x30] sm:$0xff]
        %v433 = vld [vmem:[%s360 + $0x38] sm:$0xff]
        %v434 = vld [vmem:[%s360 + $0x40] sm:$0xff]
        %v435 = vld [vmem:[%s360 + $0x48] sm:$0xff]
        %v436 = vld [vmem:[%s360 + $0x50] sm:$0xff]
        %v437 = vld [vmem:[%s360 + $0x58] sm:$0xff]
        %v438 = vld [vmem:[%s360 + $0x60] sm:$0xff]
        %v439 = vld [vmem:[%s360 + $0x68] sm:$0xff]
        %v440 = vld [vmem:[%s360 + $0x70] sm:$0xff]
        %v441 = vld [vmem:[%s360 + $0x78] sm:$0xff]
        %v442 = vld [vmem:[%s360 + $0x80] sm:$0xff]
        %v443 = vld [vmem:[%s360 + $0x88] sm:$0xff]
        %v444 = vld [vmem:[%s360 + $0x90] sm:$0xff]
        %v445 = vld [vmem:[%s360 + $0x98] sm:$0xff]
        %v446 = vld [vmem:[%s360 + $0xa0] sm:$0xff]
        %v447 = vld [vmem:[%s360 + $0xa8] sm:$0xff]
        %v448 = vld [vmem:[%s360 + $0xb0] sm:$0xff]
        %v449 = vld [vmem:[%s360 + $0xb8] sm:$0xff]
        %v450 = vld [vmem:[%s360 + $0xc0] sm:$0xff]
        %v451 = vld [vmem:[%s360 + $0xc8] sm:$0xff]
        %v452 = vld [vmem:[%s360 + $0xd0] sm:$0xff]
        %v453 = vld [vmem:[%s360 + $0xd8] sm:$0xff]
        %v454 = vld [vmem:[%s360 + $0xe0] sm:$0xff]
        %v455 = vld [vmem:[%s360 + $0xe8] sm:$0xff]
        %v456 = vld [vmem:[%s360 + $0xf0] sm:$0xff]
        %v457 = vld [vmem:[%s360 + $0xf8] sm:$0xff]
        %v458 = vld [vmem:[#allocation10] sm:$0x7]
        %v459 = vld [vmem:[#allocation5] sm:$0xff]
        %v460 = vld [vmem:[#allocation5 + $0x8] sm:$0xff]
        %v461 = vld [vmem:[#allocation5 + $0x10] sm:$0xff]
        %v462 = vld [vmem:[#allocation5 + $0x18] sm:$0xff]
        %v463 = vld [vmem:[#allocation5 + $0x20] sm:$0xff]
        %v464 = vld [vmem:[#allocation5 + $0x28] sm:$0xff]
        %v465 = vld [vmem:[#allocation5 + $0x30] sm:$0xff]
        %v466 = vld [vmem:[#allocation5 + $0x38] sm:$0xff]
        %v467 = vld [vmem:[#allocation5 + $0x40] sm:$0xff]
        %v468 = vld [vmem:[#allocation5 + $0x48] sm:$0xff]
        %v469 = vld [vmem:[#allocation5 + $0x50] sm:$0xff]
        %v470 = vld [vmem:[#allocation5 + $0x58] sm:$0xff]
        %v471 = vld [vmem:[#allocation5 + $0x60] sm:$0xff]
        %v472 = vld [vmem:[#allocation5 + $0x68] sm:$0xff]
        %v473 = vld [vmem:[#allocation5 + $0x70] sm:$0xff]
        %v474 = vld [vmem:[#allocation5 + $0x78] sm:$0xff]
        %v475 = vperm.slane %v458, 0
        %476 = vmatpush.msra.mxu0 %v474
        %477 = vmatpush.msra.mxu0 %v473
        %478 = vmatpush.msra.mxu0 %v472
        %479 = vmatpush.msra.mxu0 %v471
        %480 = vmatpush.msra.mxu0 %v470
        %481 = vmatpush.msra.mxu0 %v469
        %482 = vmatpush.msra.mxu0 %v468
        %483 = vmatpush.msra.mxu0 %v467
        %484 = vmatpush.msra.mxu0 %v466
        %485 = vmatpush.msra.mxu0 %v465
        %486 = vmatpush.msra.mxu0 %v464
        %487 = vmatpush.msra.mxu0 %v463
        %488 = vmatpush.msra.mxu0 %v462
        %489 = vmatpush.msra.mxu0 %v461
        %490 = vmatpush.msra.mxu0 %v460
        %491 = vmatpush.msra.mxu0 %v459
        %492 = vmatmul.f32.gmra.mxu0 %v426
        %v493 = vpop.f32.mrf.mxu0
        %v494 = vadd.f32 %v475, %v493
        %495 = vmatmul.f32.gmra.mxu0 %v427
        %v496 = vpop.f32.mrf.mxu0
        %v497 = vadd.f32 %v475, %v496
        %498 = vmatmul.f32.gmra.mxu0 %v428
        %v499 = vpop.f32.mrf.mxu0
        %v500 = vadd.f32 %v475, %v499
        %501 = vmatmul.f32.gmra.mxu0 %v429
        %v502 = vpop.f32.mrf.mxu0
        %v503 = vadd.f32 %v475, %v502
        %504 = vmatmul.f32.gmra.mxu0 %v430
        %v505 = vpop.f32.mrf.mxu0
        %v506 = vadd.f32 %v475, %v505
        %507 = vmatmul.f32.gmra.mxu0 %v431
        %v508 = vpop.f32.mrf.mxu0
        %v509 = vadd.f32 %v475, %v508
        %510 = vmatmul.f32.gmra.mxu0 %v432
        %v511 = vpop.f32.mrf.mxu0
        %v512 = vadd.f32 %v475, %v511
        %513 = vmatmul.f32.gmra.mxu0 %v433
        %v514 = vpop.f32.mrf.mxu0
        %v515 = vadd.f32 %v475, %v514
        %516 = vmatmul.f32.gmra.mxu0 %v434
        %v517 = vpop.f32.mrf.mxu0
        %v518 = vadd.f32 %v475, %v517
        %519 = vmatmul.f32.gmra.mxu0 %v435
        %v520 = vpop.f32.mrf.mxu0
        %v521 = vadd.f32 %v475, %v520
        %522 = vmatmul.f32.gmra.mxu0 %v436
        %v523 = vpop.f32.mrf.mxu0
        %v524 = vadd.f32 %v475, %v523
        %525 = vmatmul.f32.gmra.mxu0 %v437
        %v526 = vpop.f32.mrf.mxu0
        %v527 = vadd.f32 %v475, %v526
        %528 = vmatmul.f32.gmra.mxu0 %v438
        %v529 = vpop.f32.mrf.mxu0
        %v530 = vadd.f32 %v475, %v529
        %531 = vmatmul.f32.gmra.mxu0 %v439
        %v532 = vpop.f32.mrf.mxu0
        %v533 = vadd.f32 %v475, %v532
        %534 = vmatmul.f32.gmra.mxu0 %v440
        %v535 = vpop.f32.mrf.mxu0
        %v536 = vadd.f32 %v475, %v535
        %537 = vmatmul.f32.gmra.mxu0 %v441
        %v538 = vpop.f32.mrf.mxu0
        %v539 = vadd.f32 %v475, %v538
        %540 = vmatmul.f32.gmra.mxu0 %v442
        %v541 = vpop.f32.mrf.mxu0
        %v542 = vadd.f32 %v475, %v541
        %543 = vmatmul.f32.gmra.mxu0 %v443
        %v544 = vpop.f32.mrf.mxu0
        %v545 = vadd.f32 %v475, %v544
        %546 = vmatmul.f32.gmra.mxu0 %v444
        %v547 = vpop.f32.mrf.mxu0
        %v548 = vadd.f32 %v475, %v547
        %549 = vmatmul.f32.gmra.mxu0 %v445
        %v550 = vpop.f32.mrf.mxu0
        %v551 = vadd.f32 %v475, %v550
        %552 = vmatmul.f32.gmra.mxu0 %v446
        %v553 = vpop.f32.mrf.mxu0
        %v554 = vadd.f32 %v475, %v553
        %555 = vmatmul.f32.gmra.mxu0 %v447
        %v556 = vpop.f32.mrf.mxu0
        %v557 = vadd.f32 %v475, %v556
        %558 = vmatmul.f32.gmra.mxu0 %v448
        %v559 = vpop.f32.mrf.mxu0
        %v560 = vadd.f32 %v475, %v559
        %561 = vmatmul.f32.gmra.mxu0 %v449
        %v562 = vpop.f32.mrf.mxu0
        %v563 = vadd.f32 %v475, %v562
        %564 = vmatmul.f32.gmra.mxu0 %v450
        %v565 = vpop.f32.mrf.mxu0
        %v566 = vadd.f32 %v475, %v565
        %567 = vmatmul.f32.gmra.mxu0 %v451
        %v568 = vpop.f32.mrf.mxu0
        %v569 = vadd.f32 %v475, %v568
        %570 = vmatmul.f32.gmra.mxu0 %v452
        %v571 = vpop.f32.mrf.mxu0
        %v572 = vadd.f32 %v475, %v571
        %573 = vmatmul.f32.gmra.mxu0 %v453
        %v574 = vpop.f32.mrf.mxu0
        %v575 = vadd.f32 %v475, %v574
        %576 = vmatmul.f32.gmra.mxu0 %v454
        %v577 = vpop.f32.mrf.mxu0
        %v578 = vadd.f32 %v475, %v577
        %579 = vmatmul.f32.gmra.mxu0 %v455
        %v580 = vpop.f32.mrf.mxu0
        %v581 = vadd.f32 %v475, %v580
        %582 = vmatmul.f32.gmra.mxu0 %v456
        %v583 = vpop.f32.mrf.mxu0
        %v584 = vadd.f32 %v475, %v583
        %585 = vmatmul.f32.gmra.mxu0 %v457
        %v586 = vpop.f32.mrf.mxu0
        %v587 = vadd.f32 %v475, %v586
        %588 = vdwg.mxu0
        %v589 = vld [vmem:[#allocation7] sm:$0xff]
        %v590 = vld [vmem:[#allocation7 + $0x8] sm:$0xff]
        %v591 = vld [vmem:[#allocation7 + $0x10] sm:$0xff]
        %v592 = vld [vmem:[#allocation7 + $0x18] sm:$0xff]
        %v593 = vld [vmem:[#allocation7 + $0x20] sm:$0xff]
        %v594 = vld [vmem:[#allocation7 + $0x28] sm:$0xff]
        %v595 = vld [vmem:[#allocation7 + $0x30] sm:$0xff]
        %v596 = vld [vmem:[#allocation7 + $0x38] sm:$0xff]
        %v597 = vld [vmem:[#allocation7 + $0x40] sm:$0xff]
        %v598 = vld [vmem:[#allocation7 + $0x48] sm:$0xff]
        %v599 = vld [vmem:[#allocation7 + $0x50] sm:$0xff]
        %v600 = vld [vmem:[#allocation7 + $0x58] sm:$0xff]
        %v601 = vld [vmem:[#allocation7 + $0x60] sm:$0xff]
        %v602 = vld [vmem:[#allocation7 + $0x68] sm:$0xff]
        %v603 = vld [vmem:[#allocation7 + $0x70] sm:$0xff]
        %v604 = vld [vmem:[#allocation7 + $0x78] sm:$0xff]
        %v605 = vperm.slane %v458, 1
        %606 = vmatpush.msra.mxu0 %v604
        %607 = vmatpush.msra.mxu0 %v603
        %608 = vmatpush.msra.mxu0 %v602
        %609 = vmatpush.msra.mxu0 %v601
        %610 = vmatpush.msra.mxu0 %v600
        %611 = vmatpush.msra.mxu0 %v599
        %612 = vmatpush.msra.mxu0 %v598
        %613 = vmatpush.msra.mxu0 %v597
        %614 = vmatpush.msra.mxu0 %v596
        %615 = vmatpush.msra.mxu0 %v595
        %616 = vmatpush.msra.mxu0 %v594
        %617 = vmatpush.msra.mxu0 %v593
        %618 = vmatpush.msra.mxu0 %v592
        %619 = vmatpush.msra.mxu0 %v591
        %620 = vmatpush.msra.mxu0 %v590
        %621 = vmatpush.msra.mxu0 %v589
        %622 = vmatmul.f32.gmra.mxu0 %v426
        %v623 = vpop.f32.mrf.mxu0
        %v624 = vadd.f32 %v605, %v623
        %625 = vmatmul.f32.gmra.mxu0 %v427
        %v626 = vpop.f32.mrf.mxu0
        %v627 = vadd.f32 %v605, %v626
        %628 = vmatmul.f32.gmra.mxu0 %v428
        %v629 = vpop.f32.mrf.mxu0
        %v630 = vadd.f32 %v605, %v629
        %631 = vmatmul.f32.gmra.mxu0 %v429
        %v632 = vpop.f32.mrf.mxu0
        %v633 = vadd.f32 %v605, %v632
        %634 = vmatmul.f32.gmra.mxu0 %v430
        %v635 = vpop.f32.mrf.mxu0
        %v636 = vadd.f32 %v605, %v635
        %637 = vmatmul.f32.gmra.mxu0 %v431
        %v638 = vpop.f32.mrf.mxu0
        %v639 = vadd.f32 %v605, %v638
        %640 = vmatmul.f32.gmra.mxu0 %v432
        %v641 = vpop.f32.mrf.mxu0
        %v642 = vadd.f32 %v605, %v641
        %643 = vmatmul.f32.gmra.mxu0 %v433
        %v644 = vpop.f32.mrf.mxu0
        %v645 = vadd.f32 %v605, %v644
        %646 = vmatmul.f32.gmra.mxu0 %v434
        %v647 = vpop.f32.mrf.mxu0
        %v648 = vadd.f32 %v605, %v647
        %649 = vmatmul.f32.gmra.mxu0 %v435
        %v650 = vpop.f32.mrf.mxu0
        %v651 = vadd.f32 %v605, %v650
        %652 = vmatmul.f32.gmra.mxu0 %v436
        %v653 = vpop.f32.mrf.mxu0
        %v654 = vadd.f32 %v605, %v653
        %655 = vmatmul.f32.gmra.mxu0 %v437
        %v656 = vpop.f32.mrf.mxu0
        %v657 = vadd.f32 %v605, %v656
        %658 = vmatmul.f32.gmra.mxu0 %v438
        %v659 = vpop.f32.mrf.mxu0
        %v660 = vadd.f32 %v605, %v659
        %661 = vmatmul.f32.gmra.mxu0 %v439
        %v662 = vpop.f32.mrf.mxu0
        %v663 = vadd.f32 %v605, %v662
        %664 = vmatmul.f32.gmra.mxu0 %v440
        %v665 = vpop.f32.mrf.mxu0
        %v666 = vadd.f32 %v605, %v665
        %667 = vmatmul.f32.gmra.mxu0 %v441
        %v668 = vpop.f32.mrf.mxu0
        %v669 = vadd.f32 %v605, %v668
        %670 = vmatmul.f32.gmra.mxu0 %v442
        %v671 = vpop.f32.mrf.mxu0
        %v672 = vadd.f32 %v605, %v671
        %673 = vmatmul.f32.gmra.mxu0 %v443
        %v674 = vpop.f32.mrf.mxu0
        %v675 = vadd.f32 %v605, %v674
        %676 = vmatmul.f32.gmra.mxu0 %v444
        %v677 = vpop.f32.mrf.mxu0
        %v678 = vadd.f32 %v605, %v677
        %679 = vmatmul.f32.gmra.mxu0 %v445
        %v680 = vpop.f32.mrf.mxu0
        %v681 = vadd.f32 %v605, %v680
        %682 = vmatmul.f32.gmra.mxu0 %v446
        %v683 = vpop.f32.mrf.mxu0
        %v684 = vadd.f32 %v605, %v683
        %685 = vmatmul.f32.gmra.mxu0 %v447
        %v686 = vpop.f32.mrf.mxu0
        %v687 = vadd.f32 %v605, %v686
        %688 = vmatmul.f32.gmra.mxu0 %v448
        %v689 = vpop.f32.mrf.mxu0
        %v690 = vadd.f32 %v605, %v689
        %691 = vmatmul.f32.gmra.mxu0 %v449
        %v692 = vpop.f32.mrf.mxu0
        %v693 = vadd.f32 %v605, %v692
        %694 = vmatmul.f32.gmra.mxu0 %v450
        %v695 = vpop.f32.mrf.mxu0
        %v696 = vadd.f32 %v605, %v695
        %697 = vmatmul.f32.gmra.mxu0 %v451
        %v698 = vpop.f32.mrf.mxu0
        %v699 = vadd.f32 %v605, %v698
        %700 = vmatmul.f32.gmra.mxu0 %v452
        %v701 = vpop.f32.mrf.mxu0
        %v702 = vadd.f32 %v605, %v701
        %703 = vmatmul.f32.gmra.mxu0 %v453
        %v704 = vpop.f32.mrf.mxu0
        %v705 = vadd.f32 %v605, %v704
        %706 = vmatmul.f32.gmra.mxu0 %v454
        %v707 = vpop.f32.mrf.mxu0
        %v708 = vadd.f32 %v605, %v707
        %709 = vmatmul.f32.gmra.mxu0 %v455
        %v710 = vpop.f32.mrf.mxu0
        %v711 = vadd.f32 %v605, %v710
        %712 = vmatmul.f32.gmra.mxu0 %v456
        %v713 = vpop.f32.mrf.mxu0
        %v714 = vadd.f32 %v605, %v713
        %715 = vmatmul.f32.gmra.mxu0 %v457
        %v716 = vpop.f32.mrf.mxu0
        %v717 = vadd.f32 %v605, %v716
        %718 = vdwg.mxu0
        %v719 = vld [vmem:[#allocation8] sm:$0xff]
        %v720 = vld [vmem:[#allocation8 + $0x8] sm:$0xff]
        %v721 = vld [vmem:[#allocation8 + $0x10] sm:$0xff]
        %v722 = vld [vmem:[#allocation8 + $0x18] sm:$0xff]
        %v723 = vld [vmem:[#allocation8 + $0x20] sm:$0xff]
        %v724 = vld [vmem:[#allocation8 + $0x28] sm:$0xff]
        %v725 = vld [vmem:[#allocation8 + $0x30] sm:$0xff]
        %v726 = vld [vmem:[#allocation8 + $0x38] sm:$0xff]
        %v727 = vld [vmem:[#allocation8 + $0x40] sm:$0xff]
        %v728 = vld [vmem:[#allocation8 + $0x48] sm:$0xff]
        %v729 = vld [vmem:[#allocation8 + $0x50] sm:$0xff]
        %v730 = vld [vmem:[#allocation8 + $0x58] sm:$0xff]
        %v731 = vld [vmem:[#allocation8 + $0x60] sm:$0xff]
        %v732 = vld [vmem:[#allocation8 + $0x68] sm:$0xff]
        %v733 = vld [vmem:[#allocation8 + $0x70] sm:$0xff]
        %v734 = vld [vmem:[#allocation8 + $0x78] sm:$0xff]
        %v735 = vperm.slane %v458, 2
        %736 = vmatpush.msra.mxu0 %v734
        %737 = vmatpush.msra.mxu0 %v733
        %738 = vmatpush.msra.mxu0 %v732
        %739 = vmatpush.msra.mxu0 %v731
        %740 = vmatpush.msra.mxu0 %v730
        %741 = vmatpush.msra.mxu0 %v729
        %742 = vmatpush.msra.mxu0 %v728
        %743 = vmatpush.msra.mxu0 %v727
        %744 = vmatpush.msra.mxu0 %v726
        %745 = vmatpush.msra.mxu0 %v725
        %746 = vmatpush.msra.mxu0 %v724
        %747 = vmatpush.msra.mxu0 %v723
        %748 = vmatpush.msra.mxu0 %v722
        %749 = vmatpush.msra.mxu0 %v721
        %750 = vmatpush.msra.mxu0 %v720
        %751 = vmatpush.msra.mxu0 %v719
        %752 = vmatmul.f32.gmra.mxu0 %v426
        %v753 = vpop.f32.mrf.mxu0
        %v754 = vadd.f32 %v735, %v753
        %755 = vmatmul.f32.gmra.mxu0 %v427
        %v756 = vpop.f32.mrf.mxu0
        %v757 = vadd.f32 %v735, %v756
        %758 = vmatmul.f32.gmra.mxu0 %v428
        %v759 = vpop.f32.mrf.mxu0
        %v760 = vadd.f32 %v735, %v759
        %761 = vmatmul.f32.gmra.mxu0 %v429
        %v762 = vpop.f32.mrf.mxu0
        %v763 = vadd.f32 %v735, %v762
        %764 = vmatmul.f32.gmra.mxu0 %v430
        %v765 = vpop.f32.mrf.mxu0
        %v766 = vadd.f32 %v735, %v765
        %767 = vmatmul.f32.gmra.mxu0 %v431
        %v768 = vpop.f32.mrf.mxu0
        %v769 = vadd.f32 %v735, %v768
        %770 = vmatmul.f32.gmra.mxu0 %v432
        %v771 = vpop.f32.mrf.mxu0
        %v772 = vadd.f32 %v735, %v771
        %773 = vmatmul.f32.gmra.mxu0 %v433
        %v774 = vpop.f32.mrf.mxu0
        %v775 = vadd.f32 %v735, %v774
        %776 = vmatmul.f32.gmra.mxu0 %v434
        %v777 = vpop.f32.mrf.mxu0
        %v778 = vadd.f32 %v735, %v777
        %779 = vmatmul.f32.gmra.mxu0 %v435
        %v780 = vpop.f32.mrf.mxu0
        %v781 = vadd.f32 %v735, %v780
        %782 = vmatmul.f32.gmra.mxu0 %v436
        %v783 = vpop.f32.mrf.mxu0
        %v784 = vadd.f32 %v735, %v783
        %785 = vmatmul.f32.gmra.mxu0 %v437
        %v786 = vpop.f32.mrf.mxu0
        %v787 = vadd.f32 %v735, %v786
        %788 = vmatmul.f32.gmra.mxu0 %v438
        %v789 = vpop.f32.mrf.mxu0
        %v790 = vadd.f32 %v735, %v789
        %791 = vmatmul.f32.gmra.mxu0 %v439
        %v792 = vpop.f32.mrf.mxu0
        %v793 = vadd.f32 %v735, %v792
        %794 = vmatmul.f32.gmra.mxu0 %v440
        %v795 = vpop.f32.mrf.mxu0
        %v796 = vadd.f32 %v735, %v795
        %797 = vmatmul.f32.gmra.mxu0 %v441
        %v798 = vpop.f32.mrf.mxu0
        %v799 = vadd.f32 %v735, %v798
        %800 = vmatmul.f32.gmra.mxu0 %v442
        %v801 = vpop.f32.mrf.mxu0
        %v802 = vadd.f32 %v735, %v801
        %803 = vmatmul.f32.gmra.mxu0 %v443
        %v804 = vpop.f32.mrf.mxu0
        %v805 = vadd.f32 %v735, %v804
        %806 = vmatmul.f32.gmra.mxu0 %v444
        %v807 = vpop.f32.mrf.mxu0
        %v808 = vadd.f32 %v735, %v807
        %809 = vmatmul.f32.gmra.mxu0 %v445
        %v810 = vpop.f32.mrf.mxu0
        %v811 = vadd.f32 %v735, %v810
        %812 = vmatmul.f32.gmra.mxu0 %v446
        %v813 = vpop.f32.mrf.mxu0
        %v814 = vadd.f32 %v735, %v813
        %815 = vmatmul.f32.gmra.mxu0 %v447
        %v816 = vpop.f32.mrf.mxu0
        %v817 = vadd.f32 %v735, %v816
        %818 = vmatmul.f32.gmra.mxu0 %v448
        %v819 = vpop.f32.mrf.mxu0
        %v820 = vadd.f32 %v735, %v819
        %821 = vmatmul.f32.gmra.mxu0 %v449
        %v822 = vpop.f32.mrf.mxu0
        %v823 = vadd.f32 %v735, %v822
        %824 = vmatmul.f32.gmra.mxu0 %v450
        %v825 = vpop.f32.mrf.mxu0
        %v826 = vadd.f32 %v735, %v825
        %827 = vmatmul.f32.gmra.mxu0 %v451
        %v828 = vpop.f32.mrf.mxu0
        %v829 = vadd.f32 %v735, %v828
        %830 = vmatmul.f32.gmra.mxu0 %v452
        %v831 = vpop.f32.mrf.mxu0
        %v832 = vadd.f32 %v735, %v831
        %833 = vmatmul.f32.gmra.mxu0 %v453
        %v834 = vpop.f32.mrf.mxu0
        %v835 = vadd.f32 %v735, %v834
        %836 = vmatmul.f32.gmra.mxu0 %v454
        %v837 = vpop.f32.mrf.mxu0
        %v838 = vadd.f32 %v735, %v837
        %839 = vmatmul.f32.gmra.mxu0 %v455
        %v840 = vpop.f32.mrf.mxu0
        %v841 = vadd.f32 %v735, %v840
        %842 = vmatmul.f32.gmra.mxu0 %v456
        %v843 = vpop.f32.mrf.mxu0
        %v844 = vadd.f32 %v735, %v843
        %845 = vmatmul.f32.gmra.mxu0 %v457
        %v846 = vpop.f32.mrf.mxu0
        %v847 = vadd.f32 %v735, %v846
        %848 = vdwg.mxu0
        %v849 = vmul.f32 %v624, 0.25
        %v850 = vmul.f32 %v627, 0.25
        %v851 = vmul.f32 %v630, 0.25
        %v852 = vmul.f32 %v633, 0.25
        %v853 = vmul.f32 %v636, 0.25
        %v854 = vmul.f32 %v639, 0.25
        %v855 = vmul.f32 %v642, 0.25
        %v856 = vmul.f32 %v645, 0.25
        %v857 = vmul.f32 %v648, 0.25
        %v858 = vmul.f32 %v651, 0.25
        %v859 = vmul.f32 %v654, 0.25
        %v860 = vmul.f32 %v657, 0.25
        %v861 = vmul.f32 %v660, 0.25
        %v862 = vmul.f32 %v663, 0.25
        %v863 = vmul.f32 %v666, 0.25
        %v864 = vmul.f32 %v669, 0.25
        %v865 = vmul.f32 %v672, 0.25
        %v866 = vmul.f32 %v675, 0.25
        %v867 = vmul.f32 %v678, 0.25
        %v868 = vmul.f32 %v681, 0.25
        %v869 = vmul.f32 %v684, 0.25
        %v870 = vmul.f32 %v687, 0.25
        %v871 = vmul.f32 %v690, 0.25
        %v872 = vmul.f32 %v693, 0.25
        %v873 = vmul.f32 %v696, 0.25
        %v874 = vmul.f32 %v699, 0.25
        %v875 = vmul.f32 %v702, 0.25
        %v876 = vmul.f32 %v705, 0.25
        %v877 = vmul.f32 %v708, 0.25
        %v878 = vmul.f32 %v711, 0.25
        %v879 = vmul.f32 %v714, 0.25
        %v880 = vmul.f32 %v717, 0.25
        %v881 = vld [vmem:[#allocation13] sm:$0xff]
        %v882 = vld [vmem:[#allocation13 + $0x8] sm:$0xff]
        %v883 = vld [vmem:[#allocation13 + $0x10] sm:$0xff]
        %v884 = vld [vmem:[#allocation13 + $0x18] sm:$0xff]
        %v885 = vld [vmem:[#allocation13 + $0x20] sm:$0xff]
        %v886 = vld [vmem:[#allocation13 + $0x28] sm:$0xff]
        %v887 = vld [vmem:[#allocation13 + $0x30] sm:$0xff]
        %v888 = vld [vmem:[#allocation13 + $0x38] sm:$0xff]
        %v889 = vld [vmem:[#allocation13 + $0x40] sm:$0xff]
        %v890 = vld [vmem:[#allocation13 + $0x48] sm:$0xff]
        %v891 = vld [vmem:[#allocation13 + $0x50] sm:$0xff]
        %v892 = vld [vmem:[#allocation13 + $0x58] sm:$0xff]
        %v893 = vld [vmem:[#allocation13 + $0x60] sm:$0xff]
        %v894 = vld [vmem:[#allocation13 + $0x68] sm:$0xff]
        %v895 = vld [vmem:[#allocation13 + $0x70] sm:$0xff]
        %v896 = vld [vmem:[#allocation13 + $0x78] sm:$0xff]
        %897 = vxpose.xlu0.b32.start [1/16] %v849, 128
        %898 = vxpose.xlu0.b32.cont [2/16] %v850, 128
        %899 = vxpose.xlu0.b32.cont [3/16] %v851, 128
        %900 = vxpose.xlu0.b32.cont [4/16] %v852, 128
        %901 = vxpose.xlu0.b32.cont [5/16] %v853, 128
        %902 = vxpose.xlu0.b32.cont [6/16] %v854, 128
        %903 = vxpose.xlu0.b32.cont [7/16] %v855, 128
        %904 = vxpose.xlu0.b32.cont [8/16] %v856, 128
        %905 = vxpose.xlu0.b32.cont [9/16] %v857, 128
        %906 = vxpose.xlu0.b32.cont [10/16] %v858, 128
        %907 = vxpose.xlu0.b32.cont [11/16] %v859, 128
        %908 = vxpose.xlu0.b32.cont [12/16] %v860, 128
        %909 = vxpose.xlu0.b32.cont [13/16] %v861, 128
        %910 = vxpose.xlu0.b32.cont [14/16] %v862, 128
        %911 = vxpose.xlu0.b32.cont [15/16] %v863, 128
        %912 = vxpose.xlu0.b32.end [16/16] %v864, 128
        %v913 = vpop.trf.xlu0
        %v914 = vpop.trf.xlu0
        %v915 = vpop.trf.xlu0
        %v916 = vpop.trf.xlu0
        %v917 = vpop.trf.xlu0
        %v918 = vpop.trf.xlu0
        %v919 = vpop.trf.xlu0
        %v920 = vpop.trf.xlu0
        %v921 = vpop.trf.xlu0
        %v922 = vpop.trf.xlu0
        %v923 = vpop.trf.xlu0
        %v924 = vpop.trf.xlu0
        %v925 = vpop.trf.xlu0
        %v926 = vpop.trf.xlu0
        %v927 = vpop.trf.xlu0
        %v928 = vpop.trf.xlu0
        %929 = vmatpush.msra.mxu0 %v799
        %930 = vmatpush.msra.mxu0 %v796
        %931 = vmatpush.msra.mxu0 %v793
        %932 = vmatpush.msra.mxu0 %v790
        %933 = vmatpush.msra.mxu0 %v787
        %934 = vmatpush.msra.mxu0 %v784
        %935 = vmatpush.msra.mxu0 %v781
        %936 = vmatpush.msra.mxu0 %v778
        %937 = vmatpush.msra.mxu0 %v775
        %938 = vmatpush.msra.mxu0 %v772
        %939 = vmatpush.msra.mxu0 %v769
        %940 = vmatpush.msra.mxu0 %v766
        %941 = vmatpush.msra.mxu0 %v763
        %942 = vmatpush.msra.mxu0 %v760
        %943 = vmatpush.msra.mxu0 %v757
        %944 = vmatpush.msra.mxu0 %v754
        %945 = vmatmul.f32.gmra.mxu0 %v913
        %v946 = vpop.f32.mrf.mxu0
        %v947 = vadd.f32 %v881, %v946
        %948 = vmatmul.f32.gmra.mxu0 %v914
        %v949 = vpop.f32.mrf.mxu0
        %v950 = vadd.f32 %v882, %v949
        %951 = vmatmul.f32.gmra.mxu0 %v915
        %v952 = vpop.f32.mrf.mxu0
        %v953 = vadd.f32 %v883, %v952
        %954 = vmatmul.f32.gmra.mxu0 %v916
        %v955 = vpop.f32.mrf.mxu0
        %v956 = vadd.f32 %v884, %v955
        %957 = vmatmul.f32.gmra.mxu0 %v917
        %v958 = vpop.f32.mrf.mxu0
        %v959 = vadd.f32 %v885, %v958
        %960 = vmatmul.f32.gmra.mxu0 %v918
        %v961 = vpop.f32.mrf.mxu0
        %v962 = vadd.f32 %v886, %v961
        %963 = vmatmul.f32.gmra.mxu0 %v919
        %v964 = vpop.f32.mrf.mxu0
        %v965 = vadd.f32 %v887, %v964
        %966 = vmatmul.f32.gmra.mxu0 %v920
        %v967 = vpop.f32.mrf.mxu0
        %v968 = vadd.f32 %v888, %v967
        %969 = vmatmul.f32.gmra.mxu0 %v921
        %v970 = vpop.f32.mrf.mxu0
        %v971 = vadd.f32 %v889, %v970
        %972 = vmatmul.f32.gmra.mxu0 %v922
        %v973 = vpop.f32.mrf.mxu0
        %v974 = vadd.f32 %v890, %v973
        %975 = vmatmul.f32.gmra.mxu0 %v923
        %v976 = vpop.f32.mrf.mxu0
        %v977 = vadd.f32 %v891, %v976
        %978 = vmatmul.f32.gmra.mxu0 %v924
        %v979 = vpop.f32.mrf.mxu0
        %v980 = vadd.f32 %v892, %v979
        %981 = vmatmul.f32.gmra.mxu0 %v925
        %v982 = vpop.f32.mrf.mxu0
        %v983 = vadd.f32 %v893, %v982
        %984 = vmatmul.f32.gmra.mxu0 %v926
        %v985 = vpop.f32.mrf.mxu0
        %v986 = vadd.f32 %v894, %v985
        %987 = vmatmul.f32.gmra.mxu0 %v927
        %v988 = vpop.f32.mrf.mxu0
        %v989 = vadd.f32 %v895, %v988
        %990 = vmatmul.f32.gmra.mxu0 %v928
        %v991 = vpop.f32.mrf.mxu0
        %v992 = vadd.f32 %v896, %v991
        %993 = vdwg.mxu0
        %994 = vmax.xlane.f32.xlu0 %v947
        %v995 = vpop.xlane.xlu0 %994
        %996 = vmax.xlane.f32.xlu0 %v950
        %v997 = vpop.xlane.xlu0 %996
        %998 = vmax.xlane.f32.xlu0 %v953
        %v999 = vpop.xlane.xlu0 %998
        %1000 = vmax.xlane.f32.xlu0 %v956
        %v1001 = vpop.xlane.xlu0 %1000
        %1002 = vmax.xlane.f32.xlu0 %v959
        %v1003 = vpop.xlane.xlu0 %1002
        %1004 = vmax.xlane.f32.xlu0 %v962
        %v1005 = vpop.xlane.xlu0 %1004
        %1006 = vmax.xlane.f32.xlu0 %v965
        %v1007 = vpop.xlane.xlu0 %1006
        %1008 = vmax.xlane.f32.xlu0 %v968
        %v1009 = vpop.xlane.xlu0 %1008
        %1010 = vmax.xlane.f32.xlu0 %v971
        %v1011 = vpop.xlane.xlu0 %1010
        %1012 = vmax.xlane.f32.xlu0 %v974
        %v1013 = vpop.xlane.xlu0 %1012
        %1014 = vmax.xlane.f32.xlu0 %v977
        %v1015 = vpop.xlane.xlu0 %1014
        %1016 = vmax.xlane.f32.xlu0 %v980
        %v1017 = vpop.xlane.xlu0 %1016
        %1018 = vmax.xlane.f32.xlu0 %v983
        %v1019 = vpop.xlane.xlu0 %1018
        %1020 = vmax.xlane.f32.xlu0 %v986
        %v1021 = vpop.xlane.xlu0 %1020
        %1022 = vmax.xlane.f32.xlu0 %v989
        %v1023 = vpop.xlane.xlu0 %1022
        %1024 = vmax.xlane.f32.xlu0 %v992
        %v1025 = vpop.xlane.xlu0 %1024
        %v1026 = vsub.f32 %v947, %v995
        %v1027 = vsub.f32 %v950, %v997
        %v1028 = vsub.f32 %v953, %v999
        %v1029 = vsub.f32 %v956, %v1001
        %v1030 = vsub.f32 %v959, %v1003
        %v1031 = vsub.f32 %v962, %v1005
        %v1032 = vsub.f32 %v965, %v1007
        %v1033 = vsub.f32 %v968, %v1009
        %v1034 = vsub.f32 %v971, %v1011
        %v1035 = vsub.f32 %v974, %v1013
        %v1036 = vsub.f32 %v977, %v1015
        %v1037 = vsub.f32 %v980, %v1017
        %v1038 = vsub.f32 %v983, %v1019
        %v1039 = vsub.f32 %v986, %v1021
        %v1040 = vsub.f32 %v989, %v1023
        %v1041 = vsub.f32 %v992, %v1025
        %v1042 = vmul.f32 %v1026, 1.442695
        %v1043 = vpow.pop %v1042
        %v1044 = vmul.f32 %v1027, 1.442695
        %v1045 = vpow.pop %v1044
        %v1046 = vmul.f32 %v1028, 1.442695
        %v1047 = vpow.pop %v1046
        %v1048 = vmul.f32 %v1029, 1.442695
        %v1049 = vpow.pop %v1048
        %v1050 = vmul.f32 %v1030, 1.442695
        %v1051 = vpow.pop %v1050
        %v1052 = vmul.f32 %v1031, 1.442695
        %v1053 = vpow.pop %v1052
        %v1054 = vmul.f32 %v1032, 1.442695
        %v1055 = vpow.pop %v1054
        %v1056 = vmul.f32 %v1033, 1.442695
        %v1057 = vpow.pop %v1056
        %v1058 = vmul.f32 %v1034, 1.442695
        %v1059 = vpow.pop %v1058
        %v1060 = vmul.f32 %v1035, 1.442695
        %v1061 = vpow.pop %v1060
        %v1062 = vmul.f32 %v1036, 1.442695
        %v1063 = vpow.pop %v1062
        %v1064 = vmul.f32 %v1037, 1.442695
        %v1065 = vpow.pop %v1064
        %v1066 = vmul.f32 %v1038, 1.442695
        %v1067 = vpow.pop %v1066
        %v1068 = vmul.f32 %v1039, 1.442695
        %v1069 = vpow.pop %v1068
        %v1070 = vmul.f32 %v1040, 1.442695
        %v1071 = vpow.pop %v1070
        %v1072 = vmul.f32 %v1041, 1.442695
        %v1073 = vpow.pop %v1072
        %1074 = vadd.xlane.f32.xlu0 %v1043
        %v1075 = vpop.xlane.xlu0 %1074
        %1076 = vadd.xlane.f32.xlu0 %v1045
        %v1077 = vpop.xlane.xlu0 %1076
        %1078 = vadd.xlane.f32.xlu0 %v1047
        %v1079 = vpop.xlane.xlu0 %1078
        %1080 = vadd.xlane.f32.xlu0 %v1049
        %v1081 = vpop.xlane.xlu0 %1080
        %1082 = vadd.xlane.f32.xlu0 %v1051
        %v1083 = vpop.xlane.xlu0 %1082
        %1084 = vadd.xlane.f32.xlu0 %v1053
        %v1085 = vpop.xlane.xlu0 %1084
        %1086 = vadd.xlane.f32.xlu0 %v1055
        %v1087 = vpop.xlane.xlu0 %1086
        %1088 = vadd.xlane.f32.xlu0 %v1057
        %v1089 = vpop.xlane.xlu0 %1088
        %1090 = vadd.xlane.f32.xlu0 %v1059
        %v1091 = vpop.xlane.xlu0 %1090
        %1092 = vadd.xlane.f32.xlu0 %v1061
        %v1093 = vpop.xlane.xlu0 %1092
        %1094 = vadd.xlane.f32.xlu0 %v1063
        %v1095 = vpop.xlane.xlu0 %1094
        %1096 = vadd.xlane.f32.xlu0 %v1065
        %v1097 = vpop.xlane.xlu0 %1096
        %1098 = vadd.xlane.f32.xlu0 %v1067
        %v1099 = vpop.xlane.xlu0 %1098
        %1100 = vadd.xlane.f32.xlu0 %v1069
        %v1101 = vpop.xlane.xlu0 %1100
        %1102 = vadd.xlane.f32.xlu0 %v1071
        %v1103 = vpop.xlane.xlu0 %1102
        %1104 = vadd.xlane.f32.xlu0 %v1073
        %v1105 = vpop.xlane.xlu0 %1104
        %v1106 = vrcp.pop %v1075
        %v1107 = vmul.f32 %v1075, %v1106
        %v1108 = vsub.f32 1.0, %v1107
        %v1109 = vmul.f32 %v1106, %v1108
        %v1110 = vadd.f32 %v1106, %v1109
        %vm1111 = vweird.f32 %v1075
        %vm1112 = vweird.f32 %v1106
        %vm1113 = vmor %vm1111, %vm1112
        %v1114 = vsel %vm1113, %v1106, %v1110
        %v1115 = vand.u32 2147483647, %v1075
        %vm1116 = vcmp.eq.f32.partialorder %v1115, 8.507059e+37
        %v1117 = vand.u32 %v1075, 2147483648
        %v1118 = vor.u32 1.1754944e-38, %v1117
        %v1119 = vsel %vm1116, %v1118, %v1114
        %v1120 = vmul.f32 %v1043, %v1119
        %v1121 = vrcp.pop %v1077
        %v1122 = vmul.f32 %v1077, %v1121
        %v1123 = vsub.f32 1.0, %v1122
        %v1124 = vmul.f32 %v1121, %v1123
        %v1125 = vadd.f32 %v1121, %v1124
        %vm1126 = vweird.f32 %v1077
        %vm1127 = vweird.f32 %v1121
        %vm1128 = vmor %vm1126, %vm1127
        %v1129 = vsel %vm1128, %v1121, %v1125
        %v1130 = vand.u32 2147483647, %v1077
        %vm1131 = vcmp.eq.f32.partialorder %v1130, 8.507059e+37
        %v1132 = vand.u32 %v1077, 2147483648
        %v1133 = vor.u32 1.1754944e-38, %v1132
        %v1134 = vsel %vm1131, %v1133, %v1129
        %v1135 = vmul.f32 %v1045, %v1134
        %v1136 = vrcp.pop %v1079
        %v1137 = vmul.f32 %v1079, %v1136
        %v1138 = vsub.f32 1.0, %v1137
        %v1139 = vmul.f32 %v1136, %v1138
        %v1140 = vadd.f32 %v1136, %v1139
        %vm1141 = vweird.f32 %v1079
        %vm1142 = vweird.f32 %v1136
        %vm1143 = vmor %vm1141, %vm1142
        %v1144 = vsel %vm1143, %v1136, %v1140
        %v1145 = vand.u32 2147483647, %v1079
        %vm1146 = vcmp.eq.f32.partialorder %v1145, 8.507059e+37
        %v1147 = vand.u32 %v1079, 2147483648
        %v1148 = vor.u32 1.1754944e-38, %v1147
        %v1149 = vsel %vm1146, %v1148, %v1144
        %v1150 = vmul.f32 %v1047, %v1149
        %v1151 = vrcp.pop %v1081
        %v1152 = vmul.f32 %v1081, %v1151
        %v1153 = vsub.f32 1.0, %v1152
        %v1154 = vmul.f32 %v1151, %v1153
        %v1155 = vadd.f32 %v1151, %v1154
        %vm1156 = vweird.f32 %v1081
        %vm1157 = vweird.f32 %v1151
        %vm1158 = vmor %vm1156, %vm1157
        %v1159 = vsel %vm1158, %v1151, %v1155
        %v1160 = vand.u32 2147483647, %v1081
        %vm1161 = vcmp.eq.f32.partialorder %v1160, 8.507059e+37
        %v1162 = vand.u32 %v1081, 2147483648
        %v1163 = vor.u32 1.1754944e-38, %v1162
        %v1164 = vsel %vm1161, %v1163, %v1159
        %v1165 = vmul.f32 %v1049, %v1164
        %v1166 = vrcp.pop %v1083
        %v1167 = vmul.f32 %v1083, %v1166
        %v1168 = vsub.f32 1.0, %v1167
        %v1169 = vmul.f32 %v1166, %v1168
        %v1170 = vadd.f32 %v1166, %v1169
        %vm1171 = vweird.f32 %v1083
        %vm1172 = vweird.f32 %v1166
        %vm1173 = vmor %vm1171, %vm1172
        %v1174 = vsel %vm1173, %v1166, %v1170
        %v1175 = vand.u32 2147483647, %v1083
        %vm1176 = vcmp.eq.f32.partialorder %v1175, 8.507059e+37
        %v1177 = vand.u32 %v1083, 2147483648
        %v1178 = vor.u32 1.1754944e-38, %v1177
        %v1179 = vsel %vm1176, %v1178, %v1174
        %v1180 = vmul.f32 %v1051, %v1179
        %v1181 = vrcp.pop %v1085
        %v1182 = vmul.f32 %v1085, %v1181
        %v1183 = vsub.f32 1.0, %v1182
        %v1184 = vmul.f32 %v1181, %v1183
        %v1185 = vadd.f32 %v1181, %v1184
        %vm1186 = vweird.f32 %v1085
        %vm1187 = vweird.f32 %v1181
        %vm1188 = vmor %vm1186, %vm1187
        %v1189 = vsel %vm1188, %v1181, %v1185
        %v1190 = vand.u32 2147483647, %v1085
        %vm1191 = vcmp.eq.f32.partialorder %v1190, 8.507059e+37
        %v1192 = vand.u32 %v1085, 2147483648
        %v1193 = vor.u32 1.1754944e-38, %v1192
        %v1194 = vsel %vm1191, %v1193, %v1189
        %v1195 = vmul.f32 %v1053, %v1194
        %v1196 = vrcp.pop %v1087
        %v1197 = vmul.f32 %v1087, %v1196
        %v1198 = vsub.f32 1.0, %v1197
        %v1199 = vmul.f32 %v1196, %v1198
        %v1200 = vadd.f32 %v1196, %v1199
        %vm1201 = vweird.f32 %v1087
        %vm1202 = vweird.f32 %v1196
        %vm1203 = vmor %vm1201, %vm1202
        %v1204 = vsel %vm1203, %v1196, %v1200
        %v1205 = vand.u32 2147483647, %v1087
        %vm1206 = vcmp.eq.f32.partialorder %v1205, 8.507059e+37
        %v1207 = vand.u32 %v1087, 2147483648
        %v1208 = vor.u32 1.1754944e-38, %v1207
        %v1209 = vsel %vm1206, %v1208, %v1204
        %v1210 = vmul.f32 %v1055, %v1209
        %v1211 = vrcp.pop %v1089
        %v1212 = vmul.f32 %v1089, %v1211
        %v1213 = vsub.f32 1.0, %v1212
        %v1214 = vmul.f32 %v1211, %v1213
        %v1215 = vadd.f32 %v1211, %v1214
        %vm1216 = vweird.f32 %v1089
        %vm1217 = vweird.f32 %v1211
        %vm1218 = vmor %vm1216, %vm1217
        %v1219 = vsel %vm1218, %v1211, %v1215
        %v1220 = vand.u32 2147483647, %v1089
        %vm1221 = vcmp.eq.f32.partialorder %v1220, 8.507059e+37
        %v1222 = vand.u32 %v1089, 2147483648
        %v1223 = vor.u32 1.1754944e-38, %v1222
        %v1224 = vsel %vm1221, %v1223, %v1219
        %v1225 = vmul.f32 %v1057, %v1224
        %v1226 = vrcp.pop %v1091
        %v1227 = vmul.f32 %v1091, %v1226
        %v1228 = vsub.f32 1.0, %v1227
        %v1229 = vmul.f32 %v1226, %v1228
        %v1230 = vadd.f32 %v1226, %v1229
        %vm1231 = vweird.f32 %v1091
        %vm1232 = vweird.f32 %v1226
        %vm1233 = vmor %vm1231, %vm1232
        %v1234 = vsel %vm1233, %v1226, %v1230
        %v1235 = vand.u32 2147483647, %v1091
        %vm1236 = vcmp.eq.f32.partialorder %v1235, 8.507059e+37
        %v1237 = vand.u32 %v1091, 2147483648
        %v1238 = vor.u32 1.1754944e-38, %v1237
        %v1239 = vsel %vm1236, %v1238, %v1234
        %v1240 = vmul.f32 %v1059, %v1239
        %v1241 = vrcp.pop %v1093
        %v1242 = vmul.f32 %v1093, %v1241
        %v1243 = vsub.f32 1.0, %v1242
        %v1244 = vmul.f32 %v1241, %v1243
        %v1245 = vadd.f32 %v1241, %v1244
        %vm1246 = vweird.f32 %v1093
        %vm1247 = vweird.f32 %v1241
        %vm1248 = vmor %vm1246, %vm1247
        %v1249 = vsel %vm1248, %v1241, %v1245
        %v1250 = vand.u32 2147483647, %v1093
        %vm1251 = vcmp.eq.f32.partialorder %v1250, 8.507059e+37
        %v1252 = vand.u32 %v1093, 2147483648
        %v1253 = vor.u32 1.1754944e-38, %v1252
        %v1254 = vsel %vm1251, %v1253, %v1249
        %v1255 = vmul.f32 %v1061, %v1254
        %v1256 = vrcp.pop %v1095
        %v1257 = vmul.f32 %v1095, %v1256
        %v1258 = vsub.f32 1.0, %v1257
        %v1259 = vmul.f32 %v1256, %v1258
        %v1260 = vadd.f32 %v1256, %v1259
        %vm1261 = vweird.f32 %v1095
        %vm1262 = vweird.f32 %v1256
        %vm1263 = vmor %vm1261, %vm1262
        %v1264 = vsel %vm1263, %v1256, %v1260
        %v1265 = vand.u32 2147483647, %v1095
        %vm1266 = vcmp.eq.f32.partialorder %v1265, 8.507059e+37
        %v1267 = vand.u32 %v1095, 2147483648
        %v1268 = vor.u32 1.1754944e-38, %v1267
        %v1269 = vsel %vm1266, %v1268, %v1264
        %v1270 = vmul.f32 %v1063, %v1269
        %v1271 = vrcp.pop %v1097
        %v1272 = vmul.f32 %v1097, %v1271
        %v1273 = vsub.f32 1.0, %v1272
        %v1274 = vmul.f32 %v1271, %v1273
        %v1275 = vadd.f32 %v1271, %v1274
        %vm1276 = vweird.f32 %v1097
        %vm1277 = vweird.f32 %v1271
        %vm1278 = vmor %vm1276, %vm1277
        %v1279 = vsel %vm1278, %v1271, %v1275
        %v1280 = vand.u32 2147483647, %v1097
        %vm1281 = vcmp.eq.f32.partialorder %v1280, 8.507059e+37
        %v1282 = vand.u32 %v1097, 2147483648
        %v1283 = vor.u32 1.1754944e-38, %v1282
        %v1284 = vsel %vm1281, %v1283, %v1279
        %v1285 = vmul.f32 %v1065, %v1284
        %v1286 = vrcp.pop %v1099
        %v1287 = vmul.f32 %v1099, %v1286
        %v1288 = vsub.f32 1.0, %v1287
        %v1289 = vmul.f32 %v1286, %v1288
        %v1290 = vadd.f32 %v1286, %v1289
        %vm1291 = vweird.f32 %v1099
        %vm1292 = vweird.f32 %v1286
        %vm1293 = vmor %vm1291, %vm1292
        %v1294 = vsel %vm1293, %v1286, %v1290
        %v1295 = vand.u32 2147483647, %v1099
        %vm1296 = vcmp.eq.f32.partialorder %v1295, 8.507059e+37
        %v1297 = vand.u32 %v1099, 2147483648
        %v1298 = vor.u32 1.1754944e-38, %v1297
        %v1299 = vsel %vm1296, %v1298, %v1294
        %v1300 = vmul.f32 %v1067, %v1299
        %v1301 = vrcp.pop %v1101
        %v1302 = vmul.f32 %v1101, %v1301
        %v1303 = vsub.f32 1.0, %v1302
        %v1304 = vmul.f32 %v1301, %v1303
        %v1305 = vadd.f32 %v1301, %v1304
        %vm1306 = vweird.f32 %v1101
        %vm1307 = vweird.f32 %v1301
        %vm1308 = vmor %vm1306, %vm1307
        %v1309 = vsel %vm1308, %v1301, %v1305
        %v1310 = vand.u32 2147483647, %v1101
        %vm1311 = vcmp.eq.f32.partialorder %v1310, 8.507059e+37
        %v1312 = vand.u32 %v1101, 2147483648
        %v1313 = vor.u32 1.1754944e-38, %v1312
        %v1314 = vsel %vm1311, %v1313, %v1309
        %v1315 = vmul.f32 %v1069, %v1314
        %v1316 = vrcp.pop %v1103
        %v1317 = vmul.f32 %v1103, %v1316
        %v1318 = vsub.f32 1.0, %v1317
        %v1319 = vmul.f32 %v1316, %v1318
        %v1320 = vadd.f32 %v1316, %v1319
        %vm1321 = vweird.f32 %v1103
        %vm1322 = vweird.f32 %v1316
        %vm1323 = vmor %vm1321, %vm1322
        %v1324 = vsel %vm1323, %v1316, %v1320
        %v1325 = vand.u32 2147483647, %v1103
        %vm1326 = vcmp.eq.f32.partialorder %v1325, 8.507059e+37
        %v1327 = vand.u32 %v1103, 2147483648
        %v1328 = vor.u32 1.1754944e-38, %v1327
        %v1329 = vsel %vm1326, %v1328, %v1324
        %v1330 = vmul.f32 %v1071, %v1329
        %v1331 = vrcp.pop %v1105
        %v1332 = vmul.f32 %v1105, %v1331
        %v1333 = vsub.f32 1.0, %v1332
        %v1334 = vmul.f32 %v1331, %v1333
        %v1335 = vadd.f32 %v1331, %v1334
        %vm1336 = vweird.f32 %v1105
        %vm1337 = vweird.f32 %v1331
        %vm1338 = vmor %vm1336, %vm1337
        %v1339 = vsel %vm1338, %v1331, %v1335
        %v1340 = vand.u32 2147483647, %v1105
        %vm1341 = vcmp.eq.f32.partialorder %v1340, 8.507059e+37
        %v1342 = vand.u32 %v1105, 2147483648
        %v1343 = vor.u32 1.1754944e-38, %v1342
        %v1344 = vsel %vm1341, %v1343, %v1339
        %v1345 = vmul.f32 %v1073, %v1344
        %1346 = vmatpush.xpose.msra.mxu0 %v1345
        %1347 = vmatpush.xpose.msra.mxu0 %v1330
        %1348 = vmatpush.xpose.msra.mxu0 %v1315
        %1349 = vmatpush.xpose.msra.mxu0 %v1300
        %1350 = vmatpush.xpose.msra.mxu0 %v1285
        %1351 = vmatpush.xpose.msra.mxu0 %v1270
        %1352 = vmatpush.xpose.msra.mxu0 %v1255
        %1353 = vmatpush.xpose.msra.mxu0 %v1240
        %1354 = vmatpush.xpose.msra.mxu0 %v1225
        %1355 = vmatpush.xpose.msra.mxu0 %v1210
        %1356 = vmatpush.xpose.msra.mxu0 %v1195
        %1357 = vmatpush.xpose.msra.mxu0 %v1180
        %1358 = vmatpush.xpose.msra.mxu0 %v1165
        %1359 = vmatpush.xpose.msra.mxu0 %v1150
        %1360 = vmatpush.xpose.msra.mxu0 %v1135
        %1361 = vmatpush.xpose.msra.mxu0 %v1120
        %1362 = vmatmul.f32.gmra.mxu0 %v494
        %v1363 = vpop.f32.mrf.mxu0
        %v1364 = vadd.f32 0.0, %v1363
        %1365 = vmatmul.f32.gmra.mxu0 %v497
        %v1366 = vpop.f32.mrf.mxu0
        %v1367 = vadd.f32 0.0, %v1366
        %1368 = vmatmul.f32.gmra.mxu0 %v500
        %v1369 = vpop.f32.mrf.mxu0
        %v1370 = vadd.f32 0.0, %v1369
        %1371 = vmatmul.f32.gmra.mxu0 %v503
        %v1372 = vpop.f32.mrf.mxu0
        %v1373 = vadd.f32 0.0, %v1372
        %1374 = vmatmul.f32.gmra.mxu0 %v506
        %v1375 = vpop.f32.mrf.mxu0
        %v1376 = vadd.f32 0.0, %v1375
        %1377 = vmatmul.f32.gmra.mxu0 %v509
        %v1378 = vpop.f32.mrf.mxu0
        %v1379 = vadd.f32 0.0, %v1378
        %1380 = vmatmul.f32.gmra.mxu0 %v512
        %v1381 = vpop.f32.mrf.mxu0
        %v1382 = vadd.f32 0.0, %v1381
        %1383 = vmatmul.f32.gmra.mxu0 %v515
        %v1384 = vpop.f32.mrf.mxu0
        %v1385 = vadd.f32 0.0, %v1384
        %1386 = vmatmul.f32.gmra.mxu0 %v518
        %v1387 = vpop.f32.mrf.mxu0
        %v1388 = vadd.f32 0.0, %v1387
        %1389 = vmatmul.f32.gmra.mxu0 %v521
        %v1390 = vpop.f32.mrf.mxu0
        %v1391 = vadd.f32 0.0, %v1390
        %1392 = vmatmul.f32.gmra.mxu0 %v524
        %v1393 = vpop.f32.mrf.mxu0
        %v1394 = vadd.f32 0.0, %v1393
        %1395 = vmatmul.f32.gmra.mxu0 %v527
        %v1396 = vpop.f32.mrf.mxu0
        %v1397 = vadd.f32 0.0, %v1396
        %1398 = vmatmul.f32.gmra.mxu0 %v530
        %v1399 = vpop.f32.mrf.mxu0
        %v1400 = vadd.f32 0.0, %v1399
        %1401 = vmatmul.f32.gmra.mxu0 %v533
        %v1402 = vpop.f32.mrf.mxu0
        %v1403 = vadd.f32 0.0, %v1402
        %1404 = vmatmul.f32.gmra.mxu0 %v536
        %v1405 = vpop.f32.mrf.mxu0
        %v1406 = vadd.f32 0.0, %v1405
        %1407 = vmatmul.f32.gmra.mxu0 %v539
        %v1408 = vpop.f32.mrf.mxu0
        %v1409 = vadd.f32 0.0, %v1408
        %1410 = vdwg.mxu0
        %1411 = vxpose.xlu0.b32.start [1/16] %v865, 128
        %1412 = vxpose.xlu0.b32.cont [2/16] %v866, 128
        %1413 = vxpose.xlu0.b32.cont [3/16] %v867, 128
        %1414 = vxpose.xlu0.b32.cont [4/16] %v868, 128
        %1415 = vxpose.xlu0.b32.cont [5/16] %v869, 128
        %1416 = vxpose.xlu0.b32.cont [6/16] %v870, 128
        %1417 = vxpose.xlu0.b32.cont [7/16] %v871, 128
        %1418 = vxpose.xlu0.b32.cont [8/16] %v872, 128
        %1419 = vxpose.xlu0.b32.cont [9/16] %v873, 128
        %1420 = vxpose.xlu0.b32.cont [10/16] %v874, 128
        %1421 = vxpose.xlu0.b32.cont [11/16] %v875, 128
        %1422 = vxpose.xlu0.b32.cont [12/16] %v876, 128
        %1423 = vxpose.xlu0.b32.cont [13/16] %v877, 128
        %1424 = vxpose.xlu0.b32.cont [14/16] %v878, 128
        %1425 = vxpose.xlu0.b32.cont [15/16] %v879, 128
        %1426 = vxpose.xlu0.b32.end [16/16] %v880, 128
        %v1427 = vpop.trf.xlu0
        %v1428 = vpop.trf.xlu0
        %v1429 = vpop.trf.xlu0
        %v1430 = vpop.trf.xlu0
        %v1431 = vpop.trf.xlu0
        %v1432 = vpop.trf.xlu0
        %v1433 = vpop.trf.xlu0
        %v1434 = vpop.trf.xlu0
        %v1435 = vpop.trf.xlu0
        %v1436 = vpop.trf.xlu0
        %v1437 = vpop.trf.xlu0
        %v1438 = vpop.trf.xlu0
        %v1439 = vpop.trf.xlu0
        %v1440 = vpop.trf.xlu0
        %v1441 = vpop.trf.xlu0
        %v1442 = vpop.trf.xlu0
        %1443 = vmatpush.msra.mxu0 %v847
        %1444 = vmatpush.msra.mxu0 %v844
        %1445 = vmatpush.msra.mxu0 %v841
        %1446 = vmatpush.msra.mxu0 %v838
        %1447 = vmatpush.msra.mxu0 %v835
        %1448 = vmatpush.msra.mxu0 %v832
        %1449 = vmatpush.msra.mxu0 %v829
        %1450 = vmatpush.msra.mxu0 %v826
        %1451 = vmatpush.msra.mxu0 %v823
        %1452 = vmatpush.msra.mxu0 %v820
        %1453 = vmatpush.msra.mxu0 %v817
        %1454 = vmatpush.msra.mxu0 %v814
        %1455 = vmatpush.msra.mxu0 %v811
        %1456 = vmatpush.msra.mxu0 %v808
        %1457 = vmatpush.msra.mxu0 %v805
        %1458 = vmatpush.msra.mxu0 %v802
        %1459 = vmatmul.f32.gmra.mxu0 %v1427
        %v1460 = vpop.f32.mrf.mxu0
        %v1461 = vadd.f32 %v881, %v1460
        %1462 = vmatmul.f32.gmra.mxu0 %v1428
        %v1463 = vpop.f32.mrf.mxu0
        %v1464 = vadd.f32 %v882, %v1463
        %1465 = vmatmul.f32.gmra.mxu0 %v1429
        %v1466 = vpop.f32.mrf.mxu0
        %v1467 = vadd.f32 %v883, %v1466
        %1468 = vmatmul.f32.gmra.mxu0 %v1430
        %v1469 = vpop.f32.mrf.mxu0
        %v1470 = vadd.f32 %v884, %v1469
        %1471 = vmatmul.f32.gmra.mxu0 %v1431
        %v1472 = vpop.f32.mrf.mxu0
        %v1473 = vadd.f32 %v885, %v1472
        %1474 = vmatmul.f32.gmra.mxu0 %v1432
        %v1475 = vpop.f32.mrf.mxu0
        %v1476 = vadd.f32 %v886, %v1475
        %1477 = vmatmul.f32.gmra.mxu0 %v1433
        %v1478 = vpop.f32.mrf.mxu0
        %v1479 = vadd.f32 %v887, %v1478
        %1480 = vmatmul.f32.gmra.mxu0 %v1434
        %v1481 = vpop.f32.mrf.mxu0
        %v1482 = vadd.f32 %v888, %v1481
        %1483 = vmatmul.f32.gmra.mxu0 %v1435
        %v1484 = vpop.f32.mrf.mxu0
        %v1485 = vadd.f32 %v889, %v1484
        %1486 = vmatmul.f32.gmra.mxu0 %v1436
        %v1487 = vpop.f32.mrf.mxu0
        %v1488 = vadd.f32 %v890, %v1487
        %1489 = vmatmul.f32.gmra.mxu0 %v1437
        %v1490 = vpop.f32.mrf.mxu0
        %v1491 = vadd.f32 %v891, %v1490
        %1492 = vmatmul.f32.gmra.mxu0 %v1438
        %v1493 = vpop.f32.mrf.mxu0
        %v1494 = vadd.f32 %v892, %v1493
        %1495 = vmatmul.f32.gmra.mxu0 %v1439
        %v1496 = vpop.f32.mrf.mxu0
        %v1497 = vadd.f32 %v893, %v1496
        %1498 = vmatmul.f32.gmra.mxu0 %v1440
        %v1499 = vpop.f32.mrf.mxu0
        %v1500 = vadd.f32 %v894, %v1499
        %1501 = vmatmul.f32.gmra.mxu0 %v1441
        %v1502 = vpop.f32.mrf.mxu0
        %v1503 = vadd.f32 %v895, %v1502
        %1504 = vmatmul.f32.gmra.mxu0 %v1442
        %v1505 = vpop.f32.mrf.mxu0
        %v1506 = vadd.f32 %v896, %v1505
        %1507 = vdwg.mxu0
        %1508 = vmax.xlane.f32.xlu0 %v1461
        %v1509 = vpop.xlane.xlu0 %1508
        %1510 = vmax.xlane.f32.xlu0 %v1464
        %v1511 = vpop.xlane.xlu0 %1510
        %1512 = vmax.xlane.f32.xlu0 %v1467
        %v1513 = vpop.xlane.xlu0 %1512
        %1514 = vmax.xlane.f32.xlu0 %v1470
        %v1515 = vpop.xlane.xlu0 %1514
        %1516 = vmax.xlane.f32.xlu0 %v1473
        %v1517 = vpop.xlane.xlu0 %1516
        %1518 = vmax.xlane.f32.xlu0 %v1476
        %v1519 = vpop.xlane.xlu0 %1518
        %1520 = vmax.xlane.f32.xlu0 %v1479
        %v1521 = vpop.xlane.xlu0 %1520
        %1522 = vmax.xlane.f32.xlu0 %v1482
        %v1523 = vpop.xlane.xlu0 %1522
        %1524 = vmax.xlane.f32.xlu0 %v1485
        %v1525 = vpop.xlane.xlu0 %1524
        %1526 = vmax.xlane.f32.xlu0 %v1488
        %v1527 = vpop.xlane.xlu0 %1526
        %1528 = vmax.xlane.f32.xlu0 %v1491
        %v1529 = vpop.xlane.xlu0 %1528
        %1530 = vmax.xlane.f32.xlu0 %v1494
        %v1531 = vpop.xlane.xlu0 %1530
        %1532 = vmax.xlane.f32.xlu0 %v1497
        %v1533 = vpop.xlane.xlu0 %1532
        %1534 = vmax.xlane.f32.xlu0 %v1500
        %v1535 = vpop.xlane.xlu0 %1534
        %1536 = vmax.xlane.f32.xlu0 %v1503
        %v1537 = vpop.xlane.xlu0 %1536
        %1538 = vmax.xlane.f32.xlu0 %v1506
        %v1539 = vpop.xlane.xlu0 %1538
        %v1540 = vsub.f32 %v1461, %v1509
        %v1541 = vsub.f32 %v1464, %v1511
        %v1542 = vsub.f32 %v1467, %v1513
        %v1543 = vsub.f32 %v1470, %v1515
        %v1544 = vsub.f32 %v1473, %v1517
        %v1545 = vsub.f32 %v1476, %v1519
        %v1546 = vsub.f32 %v1479, %v1521
        %v1547 = vsub.f32 %v1482, %v1523
        %v1548 = vsub.f32 %v1485, %v1525
        %v1549 = vsub.f32 %v1488, %v1527
        %v1550 = vsub.f32 %v1491, %v1529
        %v1551 = vsub.f32 %v1494, %v1531
        %v1552 = vsub.f32 %v1497, %v1533
        %v1553 = vsub.f32 %v1500, %v1535
        %v1554 = vsub.f32 %v1503, %v1537
        %v1555 = vsub.f32 %v1506, %v1539
        %v1556 = vmul.f32 %v1540, 1.442695
        %v1557 = vpow.pop %v1556
        %v1558 = vmul.f32 %v1541, 1.442695
        %v1559 = vpow.pop %v1558
        %v1560 = vmul.f32 %v1542, 1.442695
        %v1561 = vpow.pop %v1560
        %v1562 = vmul.f32 %v1543, 1.442695
        %v1563 = vpow.pop %v1562
        %v1564 = vmul.f32 %v1544, 1.442695
        %v1565 = vpow.pop %v1564
        %v1566 = vmul.f32 %v1545, 1.442695
        %v1567 = vpow.pop %v1566
        %v1568 = vmul.f32 %v1546, 1.442695
        %v1569 = vpow.pop %v1568
        %v1570 = vmul.f32 %v1547, 1.442695
        %v1571 = vpow.pop %v1570
        %v1572 = vmul.f32 %v1548, 1.442695
        %v1573 = vpow.pop %v1572
        %v1574 = vmul.f32 %v1549, 1.442695
        %v1575 = vpow.pop %v1574
        %v1576 = vmul.f32 %v1550, 1.442695
        %v1577 = vpow.pop %v1576
        %v1578 = vmul.f32 %v1551, 1.442695
        %v1579 = vpow.pop %v1578
        %v1580 = vmul.f32 %v1552, 1.442695
        %v1581 = vpow.pop %v1580
        %v1582 = vmul.f32 %v1553, 1.442695
        %v1583 = vpow.pop %v1582
        %v1584 = vmul.f32 %v1554, 1.442695
        %v1585 = vpow.pop %v1584
        %v1586 = vmul.f32 %v1555, 1.442695
        %v1587 = vpow.pop %v1586
        %1588 = vadd.xlane.f32.xlu0 %v1557
        %v1589 = vpop.xlane.xlu0 %1588
        %1590 = vadd.xlane.f32.xlu0 %v1559
        %v1591 = vpop.xlane.xlu0 %1590
        %1592 = vadd.xlane.f32.xlu0 %v1561
        %v1593 = vpop.xlane.xlu0 %1592
        %1594 = vadd.xlane.f32.xlu0 %v1563
        %v1595 = vpop.xlane.xlu0 %1594
        %1596 = vadd.xlane.f32.xlu0 %v1565
        %v1597 = vpop.xlane.xlu0 %1596
        %1598 = vadd.xlane.f32.xlu0 %v1567
        %v1599 = vpop.xlane.xlu0 %1598
        %1600 = vadd.xlane.f32.xlu0 %v1569
        %v1601 = vpop.xlane.xlu0 %1600
        %1602 = vadd.xlane.f32.xlu0 %v1571
        %v1603 = vpop.xlane.xlu0 %1602
        %1604 = vadd.xlane.f32.xlu0 %v1573
        %v1605 = vpop.xlane.xlu0 %1604
        %1606 = vadd.xlane.f32.xlu0 %v1575
        %v1607 = vpop.xlane.xlu0 %1606
        %1608 = vadd.xlane.f32.xlu0 %v1577
        %v1609 = vpop.xlane.xlu0 %1608
        %1610 = vadd.xlane.f32.xlu0 %v1579
        %v1611 = vpop.xlane.xlu0 %1610
        %1612 = vadd.xlane.f32.xlu0 %v1581
        %v1613 = vpop.xlane.xlu0 %1612
        %1614 = vadd.xlane.f32.xlu0 %v1583
        %v1615 = vpop.xlane.xlu0 %1614
        %1616 = vadd.xlane.f32.xlu0 %v1585
        %v1617 = vpop.xlane.xlu0 %1616
        %1618 = vadd.xlane.f32.xlu0 %v1587
        %v1619 = vpop.xlane.xlu0 %1618
        %v1620 = vrcp.pop %v1589
        %v1621 = vmul.f32 %v1589, %v1620
        %v1622 = vsub.f32 1.0, %v1621
        %v1623 = vmul.f32 %v1620, %v1622
        %v1624 = vadd.f32 %v1620, %v1623
        %vm1625 = vweird.f32 %v1589
        %vm1626 = vweird.f32 %v1620
        %vm1627 = vmor %vm1625, %vm1626
        %v1628 = vsel %vm1627, %v1620, %v1624
        %v1629 = vand.u32 2147483647, %v1589
        %vm1630 = vcmp.eq.f32.partialorder %v1629, 8.507059e+37
        %v1631 = vand.u32 %v1589, 2147483648
        %v1632 = vor.u32 1.1754944e-38, %v1631
        %v1633 = vsel %vm1630, %v1632, %v1628
        %v1634 = vmul.f32 %v1557, %v1633
        %v1635 = vrcp.pop %v1591
        %v1636 = vmul.f32 %v1591, %v1635
        %v1637 = vsub.f32 1.0, %v1636
        %v1638 = vmul.f32 %v1635, %v1637
        %v1639 = vadd.f32 %v1635, %v1638
        %vm1640 = vweird.f32 %v1591
        %vm1641 = vweird.f32 %v1635
        %vm1642 = vmor %vm1640, %vm1641
        %v1643 = vsel %vm1642, %v1635, %v1639
        %v1644 = vand.u32 2147483647, %v1591
        %vm1645 = vcmp.eq.f32.partialorder %v1644, 8.507059e+37
        %v1646 = vand.u32 %v1591, 2147483648
        %v1647 = vor.u32 1.1754944e-38, %v1646
        %v1648 = vsel %vm1645, %v1647, %v1643
        %v1649 = vmul.f32 %v1559, %v1648
        %v1650 = vrcp.pop %v1593
        %v1651 = vmul.f32 %v1593, %v1650
        %v1652 = vsub.f32 1.0, %v1651
        %v1653 = vmul.f32 %v1650, %v1652
        %v1654 = vadd.f32 %v1650, %v1653
        %vm1655 = vweird.f32 %v1593
        %vm1656 = vweird.f32 %v1650
        %vm1657 = vmor %vm1655, %vm1656
        %v1658 = vsel %vm1657, %v1650, %v1654
        %v1659 = vand.u32 2147483647, %v1593
        %vm1660 = vcmp.eq.f32.partialorder %v1659, 8.507059e+37
        %v1661 = vand.u32 %v1593, 2147483648
        %v1662 = vor.u32 1.1754944e-38, %v1661
        %v1663 = vsel %vm1660, %v1662, %v1658
        %v1664 = vmul.f32 %v1561, %v1663
        %v1665 = vrcp.pop %v1595
        %v1666 = vmul.f32 %v1595, %v1665
        %v1667 = vsub.f32 1.0, %v1666
        %v1668 = vmul.f32 %v1665, %v1667
        %v1669 = vadd.f32 %v1665, %v1668
        %vm1670 = vweird.f32 %v1595
        %vm1671 = vweird.f32 %v1665
        %vm1672 = vmor %vm1670, %vm1671
        %v1673 = vsel %vm1672, %v1665, %v1669
        %v1674 = vand.u32 2147483647, %v1595
        %vm1675 = vcmp.eq.f32.partialorder %v1674, 8.507059e+37
        %v1676 = vand.u32 %v1595, 2147483648
        %v1677 = vor.u32 1.1754944e-38, %v1676
        %v1678 = vsel %vm1675, %v1677, %v1673
        %v1679 = vmul.f32 %v1563, %v1678
        %v1680 = vrcp.pop %v1597
        %v1681 = vmul.f32 %v1597, %v1680
        %v1682 = vsub.f32 1.0, %v1681
        %v1683 = vmul.f32 %v1680, %v1682
        %v1684 = vadd.f32 %v1680, %v1683
        %vm1685 = vweird.f32 %v1597
        %vm1686 = vweird.f32 %v1680
        %vm1687 = vmor %vm1685, %vm1686
        %v1688 = vsel %vm1687, %v1680, %v1684
        %v1689 = vand.u32 2147483647, %v1597
        %vm1690 = vcmp.eq.f32.partialorder %v1689, 8.507059e+37
        %v1691 = vand.u32 %v1597, 2147483648
        %v1692 = vor.u32 1.1754944e-38, %v1691
        %v1693 = vsel %vm1690, %v1692, %v1688
        %v1694 = vmul.f32 %v1565, %v1693
        %v1695 = vrcp.pop %v1599
        %v1696 = vmul.f32 %v1599, %v1695
        %v1697 = vsub.f32 1.0, %v1696
        %v1698 = vmul.f32 %v1695, %v1697
        %v1699 = vadd.f32 %v1695, %v1698
        %vm1700 = vweird.f32 %v1599
        %vm1701 = vweird.f32 %v1695
        %vm1702 = vmor %vm1700, %vm1701
        %v1703 = vsel %vm1702, %v1695, %v1699
        %v1704 = vand.u32 2147483647, %v1599
        %vm1705 = vcmp.eq.f32.partialorder %v1704, 8.507059e+37
        %v1706 = vand.u32 %v1599, 2147483648
        %v1707 = vor.u32 1.1754944e-38, %v1706
        %v1708 = vsel %vm1705, %v1707, %v1703
        %v1709 = vmul.f32 %v1567, %v1708
        %v1710 = vrcp.pop %v1601
        %v1711 = vmul.f32 %v1601, %v1710
        %v1712 = vsub.f32 1.0, %v1711
        %v1713 = vmul.f32 %v1710, %v1712
        %v1714 = vadd.f32 %v1710, %v1713
        %vm1715 = vweird.f32 %v1601
        %vm1716 = vweird.f32 %v1710
        %vm1717 = vmor %vm1715, %vm1716
        %v1718 = vsel %vm1717, %v1710, %v1714
        %v1719 = vand.u32 2147483647, %v1601
        %vm1720 = vcmp.eq.f32.partialorder %v1719, 8.507059e+37
        %v1721 = vand.u32 %v1601, 2147483648
        %v1722 = vor.u32 1.1754944e-38, %v1721
        %v1723 = vsel %vm1720, %v1722, %v1718
        %v1724 = vmul.f32 %v1569, %v1723
        %v1725 = vrcp.pop %v1603
        %v1726 = vmul.f32 %v1603, %v1725
        %v1727 = vsub.f32 1.0, %v1726
        %v1728 = vmul.f32 %v1725, %v1727
        %v1729 = vadd.f32 %v1725, %v1728
        %vm1730 = vweird.f32 %v1603
        %vm1731 = vweird.f32 %v1725
        %vm1732 = vmor %vm1730, %vm1731
        %v1733 = vsel %vm1732, %v1725, %v1729
        %v1734 = vand.u32 2147483647, %v1603
        %vm1735 = vcmp.eq.f32.partialorder %v1734, 8.507059e+37
        %v1736 = vand.u32 %v1603, 2147483648
        %v1737 = vor.u32 1.1754944e-38, %v1736
        %v1738 = vsel %vm1735, %v1737, %v1733
        %v1739 = vmul.f32 %v1571, %v1738
        %v1740 = vrcp.pop %v1605
        %v1741 = vmul.f32 %v1605, %v1740
        %v1742 = vsub.f32 1.0, %v1741
        %v1743 = vmul.f32 %v1740, %v1742
        %v1744 = vadd.f32 %v1740, %v1743
        %vm1745 = vweird.f32 %v1605
        %vm1746 = vweird.f32 %v1740
        %vm1747 = vmor %vm1745, %vm1746
        %v1748 = vsel %vm1747, %v1740, %v1744
        %v1749 = vand.u32 2147483647, %v1605
        %vm1750 = vcmp.eq.f32.partialorder %v1749, 8.507059e+37
        %v1751 = vand.u32 %v1605, 2147483648
        %v1752 = vor.u32 1.1754944e-38, %v1751
        %v1753 = vsel %vm1750, %v1752, %v1748
        %v1754 = vmul.f32 %v1573, %v1753
        %v1755 = vrcp.pop %v1607
        %v1756 = vmul.f32 %v1607, %v1755
        %v1757 = vsub.f32 1.0, %v1756
        %v1758 = vmul.f32 %v1755, %v1757
        %v1759 = vadd.f32 %v1755, %v1758
        %vm1760 = vweird.f32 %v1607
        %vm1761 = vweird.f32 %v1755
        %vm1762 = vmor %vm1760, %vm1761
        %v1763 = vsel %vm1762, %v1755, %v1759
        %v1764 = vand.u32 2147483647, %v1607
        %vm1765 = vcmp.eq.f32.partialorder %v1764, 8.507059e+37
        %v1766 = vand.u32 %v1607, 2147483648
        %v1767 = vor.u32 1.1754944e-38, %v1766
        %v1768 = vsel %vm1765, %v1767, %v1763
        %v1769 = vmul.f32 %v1575, %v1768
        %v1770 = vrcp.pop %v1609
        %v1771 = vmul.f32 %v1609, %v1770
        %v1772 = vsub.f32 1.0, %v1771
        %v1773 = vmul.f32 %v1770, %v1772
        %v1774 = vadd.f32 %v1770, %v1773
        %vm1775 = vweird.f32 %v1609
        %vm1776 = vweird.f32 %v1770
        %vm1777 = vmor %vm1775, %vm1776
        %v1778 = vsel %vm1777, %v1770, %v1774
        %v1779 = vand.u32 2147483647, %v1609
        %vm1780 = vcmp.eq.f32.partialorder %v1779, 8.507059e+37
        %v1781 = vand.u32 %v1609, 2147483648
        %v1782 = vor.u32 1.1754944e-38, %v1781
        %v1783 = vsel %vm1780, %v1782, %v1778
        %v1784 = vmul.f32 %v1577, %v1783
        %v1785 = vrcp.pop %v1611
        %v1786 = vmul.f32 %v1611, %v1785
        %v1787 = vsub.f32 1.0, %v1786
        %v1788 = vmul.f32 %v1785, %v1787
        %v1789 = vadd.f32 %v1785, %v1788
        %vm1790 = vweird.f32 %v1611
        %vm1791 = vweird.f32 %v1785
        %vm1792 = vmor %vm1790, %vm1791
        %v1793 = vsel %vm1792, %v1785, %v1789
        %v1794 = vand.u32 2147483647, %v1611
        %vm1795 = vcmp.eq.f32.partialorder %v1794, 8.507059e+37
        %v1796 = vand.u32 %v1611, 2147483648
        %v1797 = vor.u32 1.1754944e-38, %v1796
        %v1798 = vsel %vm1795, %v1797, %v1793
        %v1799 = vmul.f32 %v1579, %v1798
        %v1800 = vrcp.pop %v1613
        %v1801 = vmul.f32 %v1613, %v1800
        %v1802 = vsub.f32 1.0, %v1801
        %v1803 = vmul.f32 %v1800, %v1802
        %v1804 = vadd.f32 %v1800, %v1803
        %vm1805 = vweird.f32 %v1613
        %vm1806 = vweird.f32 %v1800
        %vm1807 = vmor %vm1805, %vm1806
        %v1808 = vsel %vm1807, %v1800, %v1804
        %v1809 = vand.u32 2147483647, %v1613
        %vm1810 = vcmp.eq.f32.partialorder %v1809, 8.507059e+37
        %v1811 = vand.u32 %v1613, 2147483648
        %v1812 = vor.u32 1.1754944e-38, %v1811
        %v1813 = vsel %vm1810, %v1812, %v1808
        %v1814 = vmul.f32 %v1581, %v1813
        %v1815 = vrcp.pop %v1615
        %v1816 = vmul.f32 %v1615, %v1815
        %v1817 = vsub.f32 1.0, %v1816
        %v1818 = vmul.f32 %v1815, %v1817
        %v1819 = vadd.f32 %v1815, %v1818
        %vm1820 = vweird.f32 %v1615
        %vm1821 = vweird.f32 %v1815
        %vm1822 = vmor %vm1820, %vm1821
        %v1823 = vsel %vm1822, %v1815, %v1819
        %v1824 = vand.u32 2147483647, %v1615
        %vm1825 = vcmp.eq.f32.partialorder %v1824, 8.507059e+37
        %v1826 = vand.u32 %v1615, 2147483648
        %v1827 = vor.u32 1.1754944e-38, %v1826
        %v1828 = vsel %vm1825, %v1827, %v1823
        %v1829 = vmul.f32 %v1583, %v1828
        %v1830 = vrcp.pop %v1617
        %v1831 = vmul.f32 %v1617, %v1830
        %v1832 = vsub.f32 1.0, %v1831
        %v1833 = vmul.f32 %v1830, %v1832
        %v1834 = vadd.f32 %v1830, %v1833
        %vm1835 = vweird.f32 %v1617
        %vm1836 = vweird.f32 %v1830
        %vm1837 = vmor %vm1835, %vm1836
        %v1838 = vsel %vm1837, %v1830, %v1834
        %v1839 = vand.u32 2147483647, %v1617
        %vm1840 = vcmp.eq.f32.partialorder %v1839, 8.507059e+37
        %v1841 = vand.u32 %v1617, 2147483648
        %v1842 = vor.u32 1.1754944e-38, %v1841
        %v1843 = vsel %vm1840, %v1842, %v1838
        %v1844 = vmul.f32 %v1585, %v1843
        %v1845 = vrcp.pop %v1619
        %v1846 = vmul.f32 %v1619, %v1845
        %v1847 = vsub.f32 1.0, %v1846
        %v1848 = vmul.f32 %v1845, %v1847
        %v1849 = vadd.f32 %v1845, %v1848
        %vm1850 = vweird.f32 %v1619
        %vm1851 = vweird.f32 %v1845
        %vm1852 = vmor %vm1850, %vm1851
        %v1853 = vsel %vm1852, %v1845, %v1849
        %v1854 = vand.u32 2147483647, %v1619
        %vm1855 = vcmp.eq.f32.partialorder %v1854, 8.507059e+37
        %v1856 = vand.u32 %v1619, 2147483648
        %v1857 = vor.u32 1.1754944e-38, %v1856
        %v1858 = vsel %vm1855, %v1857, %v1853
        %v1859 = vmul.f32 %v1587, %v1858
        %1860 = vmatpush.xpose.msra.mxu0 %v1859
        %1861 = vmatpush.xpose.msra.mxu0 %v1844
        %1862 = vmatpush.xpose.msra.mxu0 %v1829
        %1863 = vmatpush.xpose.msra.mxu0 %v1814
        %1864 = vmatpush.xpose.msra.mxu0 %v1799
        %1865 = vmatpush.xpose.msra.mxu0 %v1784
        %1866 = vmatpush.xpose.msra.mxu0 %v1769
        %1867 = vmatpush.xpose.msra.mxu0 %v1754
        %1868 = vmatpush.xpose.msra.mxu0 %v1739
        %1869 = vmatpush.xpose.msra.mxu0 %v1724
        %1870 = vmatpush.xpose.msra.mxu0 %v1709
        %1871 = vmatpush.xpose.msra.mxu0 %v1694
        %1872 = vmatpush.xpose.msra.mxu0 %v1679
        %1873 = vmatpush.xpose.msra.mxu0 %v1664
        %1874 = vmatpush.xpose.msra.mxu0 %v1649
        %1875 = vmatpush.xpose.msra.mxu0 %v1634
        %1876 = vmatmul.f32.gmra.mxu0 %v542
        %v1877 = vpop.f32.mrf.mxu0
        %v1878 = vadd.f32 0.0, %v1877
        %1879 = vmatmul.f32.gmra.mxu0 %v545
        %v1880 = vpop.f32.mrf.mxu0
        %v1881 = vadd.f32 0.0, %v1880
        %1882 = vmatmul.f32.gmra.mxu0 %v548
        %v1883 = vpop.f32.mrf.mxu0
        %v1884 = vadd.f32 0.0, %v1883
        %1885 = vmatmul.f32.gmra.mxu0 %v551
        %v1886 = vpop.f32.mrf.mxu0
        %v1887 = vadd.f32 0.0, %v1886
        %1888 = vmatmul.f32.gmra.mxu0 %v554
        %v1889 = vpop.f32.mrf.mxu0
        %v1890 = vadd.f32 0.0, %v1889
        %1891 = vmatmul.f32.gmra.mxu0 %v557
        %v1892 = vpop.f32.mrf.mxu0
        %v1893 = vadd.f32 0.0, %v1892
        %1894 = vmatmul.f32.gmra.mxu0 %v560
        %v1895 = vpop.f32.mrf.mxu0
        %v1896 = vadd.f32 0.0, %v1895
        %1897 = vmatmul.f32.gmra.mxu0 %v563
        %v1898 = vpop.f32.mrf.mxu0
        %v1899 = vadd.f32 0.0, %v1898
        %1900 = vmatmul.f32.gmra.mxu0 %v566
        %v1901 = vpop.f32.mrf.mxu0
        %v1902 = vadd.f32 0.0, %v1901
        %1903 = vmatmul.f32.gmra.mxu0 %v569
        %v1904 = vpop.f32.mrf.mxu0
        %v1905 = vadd.f32 0.0, %v1904
        %1906 = vmatmul.f32.gmra.mxu0 %v572
        %v1907 = vpop.f32.mrf.mxu0
        %v1908 = vadd.f32 0.0, %v1907
        %1909 = vmatmul.f32.gmra.mxu0 %v575
        %v1910 = vpop.f32.mrf.mxu0
        %v1911 = vadd.f32 0.0, %v1910
        %1912 = vmatmul.f32.gmra.mxu0 %v578
        %v1913 = vpop.f32.mrf.mxu0
        %v1914 = vadd.f32 0.0, %v1913
        %1915 = vmatmul.f32.gmra.mxu0 %v581
        %v1916 = vpop.f32.mrf.mxu0
        %v1917 = vadd.f32 0.0, %v1916
        %1918 = vmatmul.f32.gmra.mxu0 %v584
        %v1919 = vpop.f32.mrf.mxu0
        %v1920 = vadd.f32 0.0, %v1919
        %1921 = vmatmul.f32.gmra.mxu0 %v587
        %v1922 = vpop.f32.mrf.mxu0
        %v1923 = vadd.f32 0.0, %v1922
        %1924 = vdwg.mxu0
        %v1925 = vld [vmem:[#allocation11] sm:$0xff]
        %v1926 = vld [vmem:[#allocation11 + $0x8] sm:$0xff]
        %v1927 = vld [vmem:[#allocation11 + $0x10] sm:$0xff]
        %v1928 = vld [vmem:[#allocation11 + $0x18] sm:$0xff]
        %v1929 = vld [vmem:[#allocation11 + $0x20] sm:$0xff]
        %v1930 = vld [vmem:[#allocation11 + $0x28] sm:$0xff]
        %v1931 = vld [vmem:[#allocation11 + $0x30] sm:$0xff]
        %v1932 = vld [vmem:[#allocation11 + $0x38] sm:$0xff]
        %v1933 = vld [vmem:[#allocation11 + $0x40] sm:$0xff]
        %v1934 = vld [vmem:[#allocation11 + $0x48] sm:$0xff]
        %v1935 = vld [vmem:[#allocation11 + $0x50] sm:$0xff]
        %v1936 = vld [vmem:[#allocation11 + $0x58] sm:$0xff]
        %v1937 = vld [vmem:[#allocation11 + $0x60] sm:$0xff]
        %v1938 = vld [vmem:[#allocation11 + $0x68] sm:$0xff]
        %v1939 = vld [vmem:[#allocation11 + $0x70] sm:$0xff]
        %v1940 = vld [vmem:[#allocation11 + $0x78] sm:$0xff]
        %v1941 = vld [vmem:[%s6] sm:$0x1]
        %v1943 = vperm.slane %v1941, 0
        %1945 = vmatpush.msra.mxu0 %v1940
        %1946 = vmatpush.msra.mxu0 %v1939
        %1947 = vmatpush.msra.mxu0 %v1938
        %1948 = vmatpush.msra.mxu0 %v1937
        %1949 = vmatpush.msra.mxu0 %v1936
        %1950 = vmatpush.msra.mxu0 %v1935
        %1951 = vmatpush.msra.mxu0 %v1934
        %1952 = vmatpush.msra.mxu0 %v1933
        %1953 = vmatpush.msra.mxu0 %v1932
        %1954 = vmatpush.msra.mxu0 %v1931
        %1955 = vmatpush.msra.mxu0 %v1930
        %1956 = vmatpush.msra.mxu0 %v1929
        %1957 = vmatpush.msra.mxu0 %v1928
        %1958 = vmatpush.msra.mxu0 %v1927
        %1959 = vmatpush.msra.mxu0 %v1926
        %1960 = vmatpush.msra.mxu0 %v1925
        %1961 = vmatmul.f32.gmra.mxu0 %v1364
        %v1962 = vpop.f32.mrf.mxu0
        %v1963 = vadd.f32 %v1943, %v1962
        %1964 = vmatmul.f32.gmra.mxu0 %v1367
        %v1965 = vpop.f32.mrf.mxu0
        %v1966 = vadd.f32 %v1943, %v1965
        %1967 = vmatmul.f32.gmra.mxu0 %v1370
        %v1968 = vpop.f32.mrf.mxu0
        %v1969 = vadd.f32 %v1943, %v1968
        %1970 = vmatmul.f32.gmra.mxu0 %v1373
        %v1971 = vpop.f32.mrf.mxu0
        %v1972 = vadd.f32 %v1943, %v1971
        %1973 = vmatmul.f32.gmra.mxu0 %v1376
        %v1974 = vpop.f32.mrf.mxu0
        %v1975 = vadd.f32 %v1943, %v1974
        %1976 = vmatmul.f32.gmra.mxu0 %v1379
        %v1977 = vpop.f32.mrf.mxu0
        %v1978 = vadd.f32 %v1943, %v1977
        %1979 = vmatmul.f32.gmra.mxu0 %v1382
        %v1980 = vpop.f32.mrf.mxu0
        %v1981 = vadd.f32 %v1943, %v1980
        %1982 = vmatmul.f32.gmra.mxu0 %v1385
        %v1983 = vpop.f32.mrf.mxu0
        %v1984 = vadd.f32 %v1943, %v1983
        %1985 = vmatmul.f32.gmra.mxu0 %v1388
        %v1986 = vpop.f32.mrf.mxu0
        %v1987 = vadd.f32 %v1943, %v1986
        %1988 = vmatmul.f32.gmra.mxu0 %v1391
        %v1989 = vpop.f32.mrf.mxu0
        %v1990 = vadd.f32 %v1943, %v1989
        %1991 = vmatmul.f32.gmra.mxu0 %v1394
        %v1992 = vpop.f32.mrf.mxu0
        %v1993 = vadd.f32 %v1943, %v1992
        %1994 = vmatmul.f32.gmra.mxu0 %v1397
        %v1995 = vpop.f32.mrf.mxu0
        %v1996 = vadd.f32 %v1943, %v1995
        %1997 = vmatmul.f32.gmra.mxu0 %v1400
        %v1998 = vpop.f32.mrf.mxu0
        %v1999 = vadd.f32 %v1943, %v1998
        %2000 = vmatmul.f32.gmra.mxu0 %v1403
        %v2001 = vpop.f32.mrf.mxu0
        %v2002 = vadd.f32 %v1943, %v2001
        %2003 = vmatmul.f32.gmra.mxu0 %v1406
        %v2004 = vpop.f32.mrf.mxu0
        %v2005 = vadd.f32 %v1943, %v2004
        %2006 = vmatmul.f32.gmra.mxu0 %v1409
        %v2007 = vpop.f32.mrf.mxu0
        %v2008 = vadd.f32 %v1943, %v2007
        %2009 = vmatmul.f32.gmra.mxu0 %v1878
        %v2010 = vpop.f32.mrf.mxu0
        %v2011 = vadd.f32 %v1943, %v2010
        %2012 = vmatmul.f32.gmra.mxu0 %v1881
        %v2013 = vpop.f32.mrf.mxu0
        %v2014 = vadd.f32 %v1943, %v2013
        %2015 = vmatmul.f32.gmra.mxu0 %v1884
        %v2016 = vpop.f32.mrf.mxu0
        %v2017 = vadd.f32 %v1943, %v2016
        %2018 = vmatmul.f32.gmra.mxu0 %v1887
        %v2019 = vpop.f32.mrf.mxu0
        %v2020 = vadd.f32 %v1943, %v2019
        %2021 = vmatmul.f32.gmra.mxu0 %v1890
        %v2022 = vpop.f32.mrf.mxu0
        %v2023 = vadd.f32 %v1943, %v2022
        %2024 = vmatmul.f32.gmra.mxu0 %v1893
        %v2025 = vpop.f32.mrf.mxu0
        %v2026 = vadd.f32 %v1943, %v2025
        %2027 = vmatmul.f32.gmra.mxu0 %v1896
        %v2028 = vpop.f32.mrf.mxu0
        %v2029 = vadd.f32 %v1943, %v2028
        %2030 = vmatmul.f32.gmra.mxu0 %v1899
        %v2031 = vpop.f32.mrf.mxu0
        %v2032 = vadd.f32 %v1943, %v2031
        %2033 = vmatmul.f32.gmra.mxu0 %v1902
        %v2034 = vpop.f32.mrf.mxu0
        %v2035 = vadd.f32 %v1943, %v2034
        %2036 = vmatmul.f32.gmra.mxu0 %v1905
        %v2037 = vpop.f32.mrf.mxu0
        %v2038 = vadd.f32 %v1943, %v2037
        %2039 = vmatmul.f32.gmra.mxu0 %v1908
        %v2040 = vpop.f32.mrf.mxu0
        %v2041 = vadd.f32 %v1943, %v2040
        %2042 = vmatmul.f32.gmra.mxu0 %v1911
        %v2043 = vpop.f32.mrf.mxu0
        %v2044 = vadd.f32 %v1943, %v2043
        %2045 = vmatmul.f32.gmra.mxu0 %v1914
        %v2046 = vpop.f32.mrf.mxu0
        %v2047 = vadd.f32 %v1943, %v2046
        %2048 = vmatmul.f32.gmra.mxu0 %v1917
        %v2049 = vpop.f32.mrf.mxu0
        %v2050 = vadd.f32 %v1943, %v2049
        %2051 = vmatmul.f32.gmra.mxu0 %v1920
        %v2052 = vpop.f32.mrf.mxu0
        %v2053 = vadd.f32 %v1943, %v2052
        %2054 = vmatmul.f32.gmra.mxu0 %v1923
        %v2055 = vpop.f32.mrf.mxu0
        %v2056 = vadd.f32 %v1943, %v2055
        %2057 = vdwg.mxu0
        %2058 = vst [vmem:[%s423] sm:$0xff] %v1963
        %2059 = vst [vmem:[%s423 + $0x8] sm:$0xff] %v1966
        %2060 = vst [vmem:[%s423 + $0x10] sm:$0xff] %v1969
        %2061 = vst [vmem:[%s423 + $0x18] sm:$0xff] %v1972
        %2062 = vst [vmem:[%s423 + $0x20] sm:$0xff] %v1975
        %2063 = vst [vmem:[%s423 + $0x28] sm:$0xff] %v1978
        %2064 = vst [vmem:[%s423 + $0x30] sm:$0xff] %v1981
        %2065 = vst [vmem:[%s423 + $0x38] sm:$0xff] %v1984
        %2066 = vst [vmem:[%s423 + $0x40] sm:$0xff] %v1987
        %2067 = vst [vmem:[%s423 + $0x48] sm:$0xff] %v1990
        %2068 = vst [vmem:[%s423 + $0x50] sm:$0xff] %v1993
        %2069 = vst [vmem:[%s423 + $0x58] sm:$0xff] %v1996
        %2070 = vst [vmem:[%s423 + $0x60] sm:$0xff] %v1999
        %2071 = vst [vmem:[%s423 + $0x68] sm:$0xff] %v2002
        %2072 = vst [vmem:[%s423 + $0x70] sm:$0xff] %v2005
        %2073 = vst [vmem:[%s423 + $0x78] sm:$0xff] %v2008
        %2074 = vst [vmem:[%s423 + $0x80] sm:$0xff] %v2011
        %2075 = vst [vmem:[%s423 + $0x88] sm:$0xff] %v2014
        %2076 = vst [vmem:[%s423 + $0x90] sm:$0xff] %v2017
        %2077 = vst [vmem:[%s423 + $0x98] sm:$0xff] %v2020
        %2078 = vst [vmem:[%s423 + $0xa0] sm:$0xff] %v2023
        %2079 = vst [vmem:[%s423 + $0xa8] sm:$0xff] %v2026
        %2080 = vst [vmem:[%s423 + $0xb0] sm:$0xff] %v2029
        %2081 = vst [vmem:[%s423 + $0xb8] sm:$0xff] %v2032
        %2082 = vst [vmem:[%s423 + $0xc0] sm:$0xff] %v2035
        %2083 = vst [vmem:[%s423 + $0xc8] sm:$0xff] %v2038
        %2084 = vst [vmem:[%s423 + $0xd0] sm:$0xff] %v2041
        %2085 = vst [vmem:[%s423 + $0xd8] sm:$0xff] %v2044
        %2086 = vst [vmem:[%s423 + $0xe0] sm:$0xff] %v2047
        %2087 = vst [vmem:[%s423 + $0xe8] sm:$0xff] %v2050
        %2088 = vst [vmem:[%s423 + $0xf0] sm:$0xff] %v2053
        %2089 = vst [vmem:[%s423 + $0xf8] sm:$0xff] %v2056
        %s2090 = sand.u32 %s209, 1
        %s2091 = scalar_lea.sflag [#allocation4], %s2090
        %s2092 = sand.u32 %s209, 1
        %s2093 = smul.addr %s2092, 256
        %s2094 = scalar_lea.vmem [#allocation14], %s2093
        // Predicated region
        $region81: #{tpu_custom_call.1} parent=51 // pred_check
          %p2095 = pneg %p219
        $region82: #{tpu_custom_call.1} parent=51 // pred_check_branch
          %2097 = sbr.rel (%p2095) target = $region84
        $region83: #{tpu_custom_call.1} parent=51 // pred_region
          %s2098 = smul.u32 2, %s28
          %2100 = vsyncadd %s2091, 0
          %s2101 = smul.addr %s2098, 16
          %s2102 = smul.addr %s2101, 8
          %s2103 = scalar_lea.hbm %s8, %s2102
          %s2104 = sshll.u32 %s2094, 4
          %s2105 = int_to_ptr.vmem [resolvable:$true] %s2104
          %s2106 = sshll.u32 %s2103, 4
          %s2107 = int_to_ptr.hbm [resolvable:$true] %s2106
          %2112 = dma.vmem_to_hbm [thread:$0]  %s2105, 4096, %s2107, %s2091, 128, 128, 8
        $region84: #{tpu_custom_call.1} parent=51 // pred_fallthru
          _
      $region52: #{tpu_custom_call.1} parent=5 // pred_fallthru
        _
      %p2113 = scmp.le.s32.totalorder 2, %s23
      // Predicated region
      $region85: #{tpu_custom_call.1} parent=5 // pred_check
        %p2114 = pneg %p2113
      $region86: #{tpu_custom_call.1} parent=5 // pred_check_branch
        %2116 = sbr.rel (%p2114) target = $region88
      $region87: #{tpu_custom_call.1} parent=5 // pred_region
        %s2117 = ssub.s32 %s23, 2
        // Predicated region
        $region89: #{tpu_custom_call.1} parent=87 // pred_check
          %p2118 = pneg %p225
        $region90: #{tpu_custom_call.1} parent=87 // pred_check_branch
          %2120 = sbr.rel (%p2118) target = $region92
        $region91: #{tpu_custom_call.1} parent=87 // pred_region
          %s2121 = sand.u32 %s210, 1
          %s2122 = scalar_lea.sflag [#allocation4], %s2121
          %s2123 = sand.u32 %s210, 1
          %s2124 = smul.addr %s2123, 256
          %s2125 = scalar_lea.vmem [#allocation14], %s2124
          %2127 = dma.done %s2122, 4096
        $region92: #{tpu_custom_call.1} parent=87 // pred_fallthru
          _
      $region88: #{tpu_custom_call.1} parent=5 // pred_fallthru
        _
    $region6: #{tpu_custom_call.1} parent=1 // loop_footer
      %s27 = sadd.s32 1, %s23
    $region7: #{tpu_custom_call.1} parent=1 // loop_footer_branch
      %22 = sbr.rel target = $region3
    $region8: #{tpu_custom_call.1} parent=1 // loop_exit
      _
    %2128 = vsyncpa [#allocation3], 1
    %s2129 = scalar_lea.sflag [#allocation3], 1
    %2130 = vsyncpa %s2129, 1
    %2131 = vsyncpa [#allocation6], 1
    %2132 = vsyncpa [#allocation9], 1
    %2133 = vsyncpa [#allocation12], 1
    %2134 = vsyncpa [#allocation4], 1
    %s2135 = scalar_lea.sflag [#allocation4], 1
    %2136 = vsyncpa %s2135, 1

</llo_original>
